<compile_context>
chip_gen: v7x
topology: tpu7x:2x2x1
jax: 0.10.0
libtpu: 0.0.40
codegen_flags: <defaults>
</compile_context>

<pallas_src>
import jax
import jax.numpy as jnp
from jax.experimental import pallas as pl
from jax.experimental.pallas import tpu as pltpu


def _make_kernel(xyz_min, xyz_max, Nx, Ny, Nz):
    xmin = [float(v) for v in xyz_min]
    xmax = [float(v) for v in xyz_max]
    # align_corners=True: pixel = (x - xmin) / (xmax - xmin) * (size - 1)
    scale = (float(Nx - 1) / (xmax[0] - xmin[0]),
             float(Ny - 1) / (xmax[1] - xmin[1]),
             float(Nz - 1) / (xmax[2] - xmin[2]))

    def kernel(pts_ref, idx_ref, grid_ref, out_ref):
        # pts_ref : (3, tile_n)  world coordinates (rows x, y, z)
        # idx_ref : (V, 3)       float32 voxel indices (i, j, k) per flat voxel
        # grid_ref: (C, V)       flattened voxel grid, lane-dense on V
        # out_ref : (C, tile_n)  interpolated features, lane-dense on points
        pts = pts_ref[...]                                  # (3, tile_n)
        px = (pts[0:1, :] - xmin[0]) * scale[0]             # (1, tile_n)
        py = (pts[1:2, :] - xmin[1]) * scale[1]
        pz = (pts[2:3, :] - xmin[2]) * scale[2]

        idx = idx_ref[...]                                  # (V, 3)
        ix = idx[:, 0:1]                                    # (V, 1)
        iy = idx[:, 1:2]
        iz = idx[:, 2:3]

        # Hat-function trilinear weights; out-of-bounds corners -> weight 0
        # (== grid_sample padding_mode='zeros').
        wx = jnp.maximum(0.0, 1.0 - jnp.abs(px - ix))       # (V, tile_n)
        wy = jnp.maximum(0.0, 1.0 - jnp.abs(py - iy))
        wz = jnp.maximum(0.0, 1.0 - jnp.abs(pz - iz))
        w = wx * wy * wz                                    # (V, tile_n)

        out_ref[...] = jnp.dot(grid_ref[...], w,
                               preferred_element_type=jnp.float32)

    return kernel


def dense_grid_forward(xyz, grid_param, xyz_min, xyz_max, *, tile_n=256):
    """JAX/Pallas equivalent of DenseGrid.forward.

    xyz:        (..., 3) world coordinates.
    grid_param: (1, C, Nx, Ny, Nz) dense voxel grid (PyTorch layout).
    """
    C = grid_param.shape[1]
    Nx, Ny, Nz = grid_param.shape[2:]
    V = Nx * Ny * Nz

    # Guard the dense-weight-matrix assumption (see module header TODO).
    assert V * tile_n * 4 <= 8 * 1024 * 1024, (
        "dense (V, tile_n) trilinear weight matrix too large for VMEM; "
        "restructure with a V-reduction grid axis or DMA slab gather")

    shape = xyz.shape[:-1]
    pts = xyz.reshape(-1, 3).astype(jnp.float32)
    n = pts.shape[0]
    n_pad = ((n + tile_n - 1) // tile_n) * tile_n
    pts = jnp.pad(pts, ((0, n_pad - n), (0, 0)))
    pts_t = pts.T                                           # (3, n_pad)

    # (C, V) channel-major, voxel-minor (lane-dense on V).
    grid_flat = grid_param[0].reshape(C, V).astype(jnp.float32)

    # Per-voxel (i, j, k) index table, computed once in XLA (hoisted out of
    # the kernel: no integer divides on the VPU).
    v = jnp.arange(V, dtype=jnp.int32)
    i_of = v // (Ny * Nz)
    rem = v - i_of * (Ny * Nz)
    j_of = rem // Nz
    k_of = rem - j_of * Nz
    idx = jnp.stack([i_of, j_of, k_of], axis=-1).astype(jnp.float32)  # (V, 3)

    kernel = _make_kernel(xyz_min, xyz_max, Nx, Ny, Nz)

    out = pl.pallas_call(
        kernel,
        out_shape=jax.ShapeDtypeStruct((C, n_pad), jnp.float32),
        grid=(n_pad // tile_n,),
        in_specs=[
            pl.BlockSpec((3, tile_n), lambda i: (0, i)),    # points
            pl.BlockSpec((V, 3), lambda i: (0, 0)),         # voxel index table
            pl.BlockSpec((C, V), lambda i: (0, 0)),         # resident grid
        ],
        out_specs=pl.BlockSpec((C, tile_n), lambda i: (0, i)),  # lane-dense
        compiler_params=pltpu.CompilerParams(
            dimension_semantics=("parallel",),
            vmem_limit_bytes=32 * 1024 * 1024),
    )(pts_t, idx, grid_flat)

    out = out[:, :n].T.reshape(*shape, C)
    if C == 1:
        out = out[..., 0]
    return out


def dense_grid_forward_ref(xyz, grid_param, xyz_min, xyz_max):
    """Pure-JAX reference: F.grid_sample(bilinear, align_corners=True, zeros)."""
    grid = grid_param[0]                      # (C, Nx, Ny, Nz)
    C, Nx, Ny, Nz = grid.shape
    shape = xyz.shape[:-1]
    p = xyz.reshape(-1, 3).astype(jnp.float32)
    t = (p - xyz_min) / (xyz_max - xyz_min)
    px = t[:, 0] * (Nx - 1)
    py = t[:, 1] * (Ny - 1)
    pz = t[:, 2] * (Nz - 1)

    def corners(pv):
        i0f = jnp.floor(pv)
        w1 = pv - i0f
        i0 = i0f.astype(jnp.int32)
        return i0, i0 + 1, 1.0 - w1, w1

    i0, i1, wx0, wx1 = corners(px)
    j0, j1, wy0, wy1 = corners(py)
    k0, k1, wz0, wz1 = corners(pz)

    out = jnp.zeros((C, p.shape[0]), jnp.float32)
    for ii, wx in ((i0, wx0), (i1, wx1)):
        for jj, wy in ((j0, wy0), (j1, wy1)):
            for kk, wz in ((k0, wz0), (k1, wz1)):
                valid = ((ii >= 0) & (ii < Nx) & (jj >= 0) & (jj < Ny) &
                         (kk >= 0) & (kk < Nz))
                ic = jnp.clip(ii, 0, Nx - 1)
                jc = jnp.clip(jj, 0, Ny - 1)
                kc = jnp.clip(kk, 0, Nz - 1)
                vals = grid[:, ic, jc, kc]                      # (C, N)
                w = (wx * wy * wz) * valid.astype(jnp.float32)
                out = out + vals * w[None, :]

    out = out.T.reshape(*shape, C)
    if C == 1:
        out = out[..., 0]
    return out


if __name__ == "__main__":
    key = jax.random.PRNGKey(0)
    k_grid, k_xyz = jax.random.split(key)

    channels = 4
    world_size = (8, 8, 8)
    xyz_min = jnp.array([-1.0, -1.0, -1.0], jnp.float32)
    xyz_max = jnp.array([1.0, 1.0, 1.0], jnp.float32)

    # nn.Parameter(torch.zeros(...)) in __init__; use deterministic random
    # values here so the interpolation is non-trivial.
    grid_param = 0.1 * jax.random.normal(
        k_grid, (1, channels, *world_size), jnp.float32)

    # Query points: batch=2, 60 points each, slightly outside the bounds to
    # exercise the zero-padding path.
    xyz = jax.random.uniform(
        k_xyz, (2, 60, 3), jnp.float32, minval=-1.2, maxval=1.2)

    out = dense_grid_forward(xyz, grid_param, xyz_min, xyz_max)
    out = jax.block_until_ready(out)

    ref = dense_grid_forward_ref(xyz, grid_param, xyz_min, xyz_max)
    assert out.shape == (2, 60, channels), out.shape
    assert jnp.allclose(out, ref, rtol=1e-5, atol=1e-5), (
        float(jnp.max(jnp.abs(out - ref))))

    # TODO(synk): scale_volume_grid (trilinear F.interpolate) and the in-place
    # __isub__ helper are training/utility paths, not part of forward; not
    # implemented as kernels.
    print("KERNEL_OK")
</pallas_src>

<mosaic_0001>
module attributes {stable_mosaic.version = 11 : i64} {
  func.func @kernel(%arg0: i32, %arg1: memref<3x256xf32, #tpu.memory_space<vmem>>, %arg2: memref<512x3xf32, #tpu.memory_space<vmem>>, %arg3: memref<4x512xf32, #tpu.memory_space<vmem>>, %arg4: memref<4x256xf32, #tpu.memory_space<vmem>>) attributes {dimension_semantics = [#tpu.dimension_semantics<parallel>], iteration_bounds = array<i64: 1>, scalar_prefetch = 0 : i64, scratch_operands = 0 : i64, tpu.core_type = #tpu.core_type<tc>, window_params = [{transform_indices = @transform_0, window_bounds = array<i64: 3, 256>}, {pipeline_mode = #tpu.pipeline_mode<synchronous>, transform_indices = @transform_1, window_bounds = array<i64: 512, 3>}, {pipeline_mode = #tpu.pipeline_mode<synchronous>, transform_indices = @transform_2, window_bounds = array<i64: 4, 512>}, {transform_indices = @transform_3, window_bounds = array<i64: 4, 256>}]} {
    %c0 = arith.constant 0 : index
    %c0_0 = arith.constant 0 : index
    %0 = vector.load %arg1[%c0, %c0_0] : memref<3x256xf32, #tpu.memory_space<vmem>>, vector<3x256xf32>
    %1 = vector.extract_strided_slice %0 {offsets = [0, 0], sizes = [1, 256], strides = [1, 1]} : vector<3x256xf32> to vector<1x256xf32>
    %cst = arith.constant -1.000000e+00 : f32
    %2 = vector.broadcast %cst : f32 to vector<1x256xf32>
    %3 = arith.subf %1, %2 : vector<1x256xf32>
    %cst_1 = arith.constant 3.500000e+00 : f32
    %4 = vector.broadcast %cst_1 : f32 to vector<1x256xf32>
    %5 = arith.mulf %3, %4 : vector<1x256xf32>
    %6 = vector.extract_strided_slice %0 {offsets = [1, 0], sizes = [1, 256], strides = [1, 1]} : vector<3x256xf32> to vector<1x256xf32>
    %cst_2 = arith.constant -1.000000e+00 : f32
    %7 = vector.broadcast %cst_2 : f32 to vector<1x256xf32>
    %8 = arith.subf %6, %7 : vector<1x256xf32>
    %cst_3 = arith.constant 3.500000e+00 : f32
    %9 = vector.broadcast %cst_3 : f32 to vector<1x256xf32>
    %10 = arith.mulf %8, %9 : vector<1x256xf32>
    %11 = vector.extract_strided_slice %0 {offsets = [2, 0], sizes = [1, 256], strides = [1, 1]} : vector<3x256xf32> to vector<1x256xf32>
    %cst_4 = arith.constant -1.000000e+00 : f32
    %12 = vector.broadcast %cst_4 : f32 to vector<1x256xf32>
    %13 = arith.subf %11, %12 : vector<1x256xf32>
    %cst_5 = arith.constant 3.500000e+00 : f32
    %14 = vector.broadcast %cst_5 : f32 to vector<1x256xf32>
    %15 = arith.mulf %13, %14 : vector<1x256xf32>
    %c0_6 = arith.constant 0 : index
    %c0_7 = arith.constant 0 : index
    %16 = vector.load %arg2[%c0_6, %c0_7] : memref<512x3xf32, #tpu.memory_space<vmem>>, vector<512x3xf32>
    %17 = vector.extract_strided_slice %16 {offsets = [0, 0], sizes = [512, 1], strides = [1, 1]} : vector<512x3xf32> to vector<512x1xf32>
    %18 = vector.extract_strided_slice %16 {offsets = [0, 1], sizes = [512, 1], strides = [1, 1]} : vector<512x3xf32> to vector<512x1xf32>
    %19 = vector.extract_strided_slice %16 {offsets = [0, 2], sizes = [512, 1], strides = [1, 1]} : vector<512x3xf32> to vector<512x1xf32>
    %20 = vector.broadcast %5 : vector<1x256xf32> to vector<512x256xf32>
    %21 = vector.broadcast %17 : vector<512x1xf32> to vector<512x256xf32>
    %22 = arith.subf %20, %21 : vector<512x256xf32>
    %23 = math.absf %22 : vector<512x256xf32>
    %cst_8 = arith.constant 1.000000e+00 : f32
    %24 = vector.broadcast %cst_8 : f32 to vector<512x256xf32>
    %25 = arith.subf %24, %23 : vector<512x256xf32>
    %cst_9 = arith.constant 0.000000e+00 : f32
    %26 = vector.broadcast %cst_9 : f32 to vector<512x256xf32>
    %27 = arith.maximumf %26, %25 : vector<512x256xf32>
    %28 = vector.broadcast %10 : vector<1x256xf32> to vector<512x256xf32>
    %29 = vector.broadcast %18 : vector<512x1xf32> to vector<512x256xf32>
    %30 = arith.subf %28, %29 : vector<512x256xf32>
    %31 = math.absf %30 : vector<512x256xf32>
    %cst_10 = arith.constant 1.000000e+00 : f32
    %32 = vector.broadcast %cst_10 : f32 to vector<512x256xf32>
    %33 = arith.subf %32, %31 : vector<512x256xf32>
    %cst_11 = arith.constant 0.000000e+00 : f32
    %34 = vector.broadcast %cst_11 : f32 to vector<512x256xf32>
    %35 = arith.maximumf %34, %33 : vector<512x256xf32>
    %36 = vector.broadcast %15 : vector<1x256xf32> to vector<512x256xf32>
    %37 = vector.broadcast %19 : vector<512x1xf32> to vector<512x256xf32>
    %38 = arith.subf %36, %37 : vector<512x256xf32>
    %39 = math.absf %38 : vector<512x256xf32>
    %cst_12 = arith.constant 1.000000e+00 : f32
    %40 = vector.broadcast %cst_12 : f32 to vector<512x256xf32>
    %41 = arith.subf %40, %39 : vector<512x256xf32>
    %cst_13 = arith.constant 0.000000e+00 : f32
    %42 = vector.broadcast %cst_13 : f32 to vector<512x256xf32>
    %43 = arith.maximumf %42, %41 : vector<512x256xf32>
    %44 = arith.mulf %27, %35 : vector<512x256xf32>
    %45 = arith.mulf %44, %43 : vector<512x256xf32>
    %c0_14 = arith.constant 0 : index
    %c0_15 = arith.constant 0 : index
    %46 = vector.load %arg3[%c0_14, %c0_15] : memref<4x512xf32, #tpu.memory_space<vmem>>, vector<4x512xf32>
    %cst_16 = arith.constant dense<0.000000e+00> : vector<4x256xf32>
    %47 = tpu.matmul %46, %45, %cst_16 {dimension_numbers = #tpu.dot_dimension_numbers<[1], [0], [0], [1], [0, 0, 1, 1], [], []>} : vector<4x512xf32>, vector<512x256xf32>, vector<4x256xf32> -> vector<4x256xf32>
    %c0_17 = arith.constant 0 : index
    %c0_18 = arith.constant 0 : index
    %48 = vector.load %arg4[%c0_17, %c0_18] : memref<4x256xf32, #tpu.memory_space<vmem>>, vector<4x256xf32>
    tpu.vector_store %arg4[%c0_17, %c0_18], %47 {strides = array<i32>} : memref<4x256xf32, #tpu.memory_space<vmem>>, vector<4x256xf32>,
    return
  }
  func.func @transform_0(%arg0: i32) -> (i32, i32) {
    %c0_i32 = arith.constant 0 : i32
    %c0_i32_0 = arith.constant 0 : i32
    return %c0_i32, %arg0 : i32, i32
  }
  func.func @transform_1(%arg0: i32) -> (i32, i32) {
    %c0_i32 = arith.constant 0 : i32
    %c0_i32_0 = arith.constant 0 : i32
    %c0_i32_1 = arith.constant 0 : i32
    return %c0_i32, %c0_i32_0 : i32, i32
  }
  func.func @transform_2(%arg0: i32) -> (i32, i32) {
    %c0_i32 = arith.constant 0 : i32
    %c0_i32_0 = arith.constant 0 : i32
    %c0_i32_1 = arith.constant 0 : i32
    return %c0_i32, %c0_i32_0 : i32, i32
  }
  func.func @transform_3(%arg0: i32) -> (i32, i32) {
    %c0_i32 = arith.constant 0 : i32
    %c0_i32_0 = arith.constant 0 : i32
    return %c0_i32, %arg0 : i32, i32
  }
}

</mosaic_0001>

<llo_original>
// kernel: tpu_custom_call.1
$region0: #{tpu_custom_call.1}
  #allocation0 [shape = 'u32[]', space=smem, size = 0x4, offset = 0x4, fixed_abs, tag = 'smem constant byte address 0x4 - core index']
  #allocation1 [shape = 'u32[144,128]{1,0:T(1,128)}', space=vmem, size = 0x12000, scoped, tag = 'internal scratch']
  %s0 = inlined_call_operand.vmem [shape: f32[3,256], index: 0, kind: input, shape index: {}]
  %s1 = inlined_call_operand.vmem [shape: f32[512,3], index: 1, kind: input, shape index: {}]
  %s2 = inlined_call_operand.vmem [shape: f32[4,512], index: 2, kind: input, shape index: {}]
  %s3 = inlined_call_operand.hbm [shape: f32[4,256], index: 3, kind: output, shape index: {}]
  %s4 = sld [smem:[#allocation0]]
  $region22: #{tpu_custom_call.1} parent=0
    _
  %s6 = ssub.s32 1, %s4
  %s7 = scalar_select 0, %s6, %s4
  $region1: #{tpu_custom_call.1} parent=0
    #allocation2 [shape = 'u8[4096]{0}', space=vmem, size = 0x1000, scoped, tag = 'output window, operand 0, single buffered']
    #allocation3 [shape = 's32[1]{0}', space=sflag, size = 0x4, scoped, tag = 'scoped memory for tpu_custom_call.1']
    %8 = vsyncpa [#allocation3], 0
    // Predicated region
    $region2: #{tpu_custom_call.1} parent=1 // pred_check
      _
    $region3: #{tpu_custom_call.1} parent=1 // pred_check_branch
      %10 = sbr.rel (0) target = $region5
    $region4: #{tpu_custom_call.1} parent=1 // pred_region
      _
    $region5: #{tpu_custom_call.1} parent=1 // pred_fallthru
      _
    // Predicated region
    $region6: #{tpu_custom_call.1} parent=1 // pred_check
      _
    $region7: #{tpu_custom_call.1} parent=1 // pred_check_branch
      %12 = sbr.rel (0) target = $region9
    $region8: #{tpu_custom_call.1} parent=1 // pred_region
      _
    $region9: #{tpu_custom_call.1} parent=1 // pred_fallthru
      _
    // Predicated region
    $region10: #{tpu_custom_call.1} parent=1 // pred_check
      _
    $region11: #{tpu_custom_call.1} parent=1 // pred_check_branch
      %14 = sbr.rel (0) target = $region13
    $region12: #{tpu_custom_call.1} parent=1 // pred_region
      _
    $region13: #{tpu_custom_call.1} parent=1 // pred_fallthru
      _
    %v15 = vld [vmem:[%s0] sm:$0x77]
    %v16 = vsub.f32 %v15, -1.0
    %v17 = vmul.f32 %v16, 3.5
    %v18 = vld [vmem:[%s1] sm:$0xff]
    %v19 = vld [vmem:[%s1 + $0x8] sm:$0xff]
    %v20 = vld [vmem:[%s1 + $0x10] sm:$0xff]
    %v21 = vld [vmem:[%s1 + $0x18] sm:$0xff]
    %v22 = vld [vmem:[%s1 + $0x20] sm:$0xff]
    %v23 = vld [vmem:[%s1 + $0x28] sm:$0xff]
    %v24 = vld [vmem:[%s1 + $0x30] sm:$0xff]
    %v25 = vld [vmem:[%s1 + $0x38] sm:$0xff]
    %v26 = vld [vmem:[%s1 + $0x40] sm:$0xff]
    %v27 = vld [vmem:[%s1 + $0x48] sm:$0xff]
    %v28 = vld [vmem:[%s1 + $0x50] sm:$0xff]
    %v29 = vld [vmem:[%s1 + $0x58] sm:$0xff]
    %v30 = vld [vmem:[%s1 + $0x60] sm:$0xff]
    %v31 = vld [vmem:[%s1 + $0x68] sm:$0xff]
    %v32 = vld [vmem:[%s1 + $0x70] sm:$0xff]
    %v33 = vld [vmem:[%s1 + $0x78] sm:$0xff]
    %v34 = vld [vmem:[%s1 + $0x80] sm:$0xff]
    %v35 = vld [vmem:[%s1 + $0x88] sm:$0xff]
    %v36 = vld [vmem:[%s1 + $0x90] sm:$0xff]
    %v37 = vld [vmem:[%s1 + $0x98] sm:$0xff]
    %v38 = vld [vmem:[%s1 + $0xa0] sm:$0xff]
    %v39 = vld [vmem:[%s1 + $0xa8] sm:$0xff]
    %v40 = vld [vmem:[%s1 + $0xb0] sm:$0xff]
    %v41 = vld [vmem:[%s1 + $0xb8] sm:$0xff]
    %v42 = vld [vmem:[%s1 + $0xc0] sm:$0xff]
    %v43 = vld [vmem:[%s1 + $0xc8] sm:$0xff]
    %v44 = vld [vmem:[%s1 + $0xd0] sm:$0xff]
    %v45 = vld [vmem:[%s1 + $0xd8] sm:$0xff]
    %v46 = vld [vmem:[%s1 + $0xe0] sm:$0xff]
    %v47 = vld [vmem:[%s1 + $0xe8] sm:$0xff]
    %v48 = vld [vmem:[%s1 + $0xf0] sm:$0xff]
    %v49 = vld [vmem:[%s1 + $0xf8] sm:$0xff]
    %v50 = vld [vmem:[%s1 + $0x100] sm:$0xff]
    %v51 = vld [vmem:[%s1 + $0x108] sm:$0xff]
    %v52 = vld [vmem:[%s1 + $0x110] sm:$0xff]
    %v53 = vld [vmem:[%s1 + $0x118] sm:$0xff]
    %v54 = vld [vmem:[%s1 + $0x120] sm:$0xff]
    %v55 = vld [vmem:[%s1 + $0x128] sm:$0xff]
    %v56 = vld [vmem:[%s1 + $0x130] sm:$0xff]
    %v57 = vld [vmem:[%s1 + $0x138] sm:$0xff]
    %v58 = vld [vmem:[%s1 + $0x140] sm:$0xff]
    %v59 = vld [vmem:[%s1 + $0x148] sm:$0xff]
    %v60 = vld [vmem:[%s1 + $0x150] sm:$0xff]
    %v61 = vld [vmem:[%s1 + $0x158] sm:$0xff]
    %v62 = vld [vmem:[%s1 + $0x160] sm:$0xff]
    %v63 = vld [vmem:[%s1 + $0x168] sm:$0xff]
    %v64 = vld [vmem:[%s1 + $0x170] sm:$0xff]
    %v65 = vld [vmem:[%s1 + $0x178] sm:$0xff]
    %v66 = vld [vmem:[%s1 + $0x180] sm:$0xff]
    %v67 = vld [vmem:[%s1 + $0x188] sm:$0xff]
    %v68 = vld [vmem:[%s1 + $0x190] sm:$0xff]
    %v69 = vld [vmem:[%s1 + $0x198] sm:$0xff]
    %v70 = vld [vmem:[%s1 + $0x1a0] sm:$0xff]
    %v71 = vld [vmem:[%s1 + $0x1a8] sm:$0xff]
    %v72 = vld [vmem:[%s1 + $0x1b0] sm:$0xff]
    %v73 = vld [vmem:[%s1 + $0x1b8] sm:$0xff]
    %v74 = vld [vmem:[%s1 + $0x1c0] sm:$0xff]
    %v75 = vld [vmem:[%s1 + $0x1c8] sm:$0xff]
    %v76 = vld [vmem:[%s1 + $0x1d0] sm:$0xff]
    %v77 = vld [vmem:[%s1 + $0x1d8] sm:$0xff]
    %v78 = vld [vmem:[%s1 + $0x1e0] sm:$0xff]
    %v79 = vld [vmem:[%s1 + $0x1e8] sm:$0xff]
    %v80 = vld [vmem:[%s1 + $0x1f0] sm:$0xff]
    %v81 = vld [vmem:[%s1 + $0x1f8] sm:$0xff]
    %v83 = vlaneseq
    %v84 = vshrl.u32 %v83, 7
    %v85 = vsub.s32 0, %v84
    %v86 = vrot.slane %v17, %v85
    %v87 = vlaneseq
    %v88 = vshrl.u32 %v87, 7
    %v89 = vsub.s32 4, %v88
    %v90 = vrot.slane %v17, %v89
    %v93 = vlaneseq
    %v94 = vshrl.u32 %v93, 7
    %v95 = vsub.s32 0, %v94
    %v96 = vrot.slane %v86, %v95
    %v97 = vlaneseq
    %v98 = vshrl.u32 %v97, 7
    %v99 = vsub.s32 0, %v98
    %v100 = vrot.slane %v90, %v99
    %102 = vset.pattern.permute.xlu0 0
    %103 = vperm.xlu0 %102, %v18
    %v104 = vpop.permute.xlu0 %103
    %107 = vset.pattern.permute.xlu0 0
    %108 = vperm.xlu0 %107, %v19
    %v109 = vpop.permute.xlu0 %108
    %112 = vset.pattern.permute.xlu0 0
    %113 = vperm.xlu0 %112, %v20
    %v114 = vpop.permute.xlu0 %113
    %117 = vset.pattern.permute.xlu0 0
    %118 = vperm.xlu0 %117, %v21
    %v119 = vpop.permute.xlu0 %118
    %122 = vset.pattern.permute.xlu0 0
    %123 = vperm.xlu0 %122, %v22
    %v124 = vpop.permute.xlu0 %123
    %127 = vset.pattern.permute.xlu0 0
    %128 = vperm.xlu0 %127, %v23
    %v129 = vpop.permute.xlu0 %128
    %132 = vset.pattern.permute.xlu0 0
    %133 = vperm.xlu0 %132, %v24
    %v134 = vpop.permute.xlu0 %133
    %137 = vset.pattern.permute.xlu0 0
    %138 = vperm.xlu0 %137, %v25
    %v139 = vpop.permute.xlu0 %138
    %142 = vset.pattern.permute.xlu0 0
    %143 = vperm.xlu0 %142, %v26
    %v144 = vpop.permute.xlu0 %143
    %147 = vset.pattern.permute.xlu0 0
    %148 = vperm.xlu0 %147, %v27
    %v149 = vpop.permute.xlu0 %148
    %152 = vset.pattern.permute.xlu0 0
    %153 = vperm.xlu0 %152, %v28
    %v154 = vpop.permute.xlu0 %153
    %157 = vset.pattern.permute.xlu0 0
    %158 = vperm.xlu0 %157, %v29
    %v159 = vpop.permute.xlu0 %158
    %162 = vset.pattern.permute.xlu0 0
    %163 = vperm.xlu0 %162, %v30
    %v164 = vpop.permute.xlu0 %163
    %167 = vset.pattern.permute.xlu0 0
    %168 = vperm.xlu0 %167, %v31
    %v169 = vpop.permute.xlu0 %168
    %172 = vset.pattern.permute.xlu0 0
    %173 = vperm.xlu0 %172, %v32
    %v174 = vpop.permute.xlu0 %173
    %177 = vset.pattern.permute.xlu0 0
    %178 = vperm.xlu0 %177, %v33
    %v179 = vpop.permute.xlu0 %178
    %182 = vset.pattern.permute.xlu0 0
    %183 = vperm.xlu0 %182, %v34
    %v184 = vpop.permute.xlu0 %183
    %187 = vset.pattern.permute.xlu0 0
    %188 = vperm.xlu0 %187, %v35
    %v189 = vpop.permute.xlu0 %188
    %192 = vset.pattern.permute.xlu0 0
    %193 = vperm.xlu0 %192, %v36
    %v194 = vpop.permute.xlu0 %193
    %197 = vset.pattern.permute.xlu0 0
    %198 = vperm.xlu0 %197, %v37
    %v199 = vpop.permute.xlu0 %198
    %202 = vset.pattern.permute.xlu0 0
    %203 = vperm.xlu0 %202, %v38
    %v204 = vpop.permute.xlu0 %203
    %207 = vset.pattern.permute.xlu0 0
    %208 = vperm.xlu0 %207, %v39
    %v209 = vpop.permute.xlu0 %208
    %212 = vset.pattern.permute.xlu0 0
    %213 = vperm.xlu0 %212, %v40
    %v214 = vpop.permute.xlu0 %213
    %217 = vset.pattern.permute.xlu0 0
    %218 = vperm.xlu0 %217, %v41
    %v219 = vpop.permute.xlu0 %218
    %222 = vset.pattern.permute.xlu0 0
    %223 = vperm.xlu0 %222, %v42
    %v224 = vpop.permute.xlu0 %223
    %227 = vset.pattern.permute.xlu0 0
    %228 = vperm.xlu0 %227, %v43
    %v229 = vpop.permute.xlu0 %228
    %232 = vset.pattern.permute.xlu0 0
    %233 = vperm.xlu0 %232, %v44
    %v234 = vpop.permute.xlu0 %233
    %237 = vset.pattern.permute.xlu0 0
    %238 = vperm.xlu0 %237, %v45
    %v239 = vpop.permute.xlu0 %238
    %242 = vset.pattern.permute.xlu0 0
    %243 = vperm.xlu0 %242, %v46
    %v244 = vpop.permute.xlu0 %243
    %247 = vset.pattern.permute.xlu0 0
    %248 = vperm.xlu0 %247, %v47
    %v249 = vpop.permute.xlu0 %248
    %252 = vset.pattern.permute.xlu0 0
    %253 = vperm.xlu0 %252, %v48
    %v254 = vpop.permute.xlu0 %253
    %257 = vset.pattern.permute.xlu0 0
    %258 = vperm.xlu0 %257, %v49
    %v259 = vpop.permute.xlu0 %258
    %262 = vset.pattern.permute.xlu0 0
    %263 = vperm.xlu0 %262, %v50
    %v264 = vpop.permute.xlu0 %263
    %267 = vset.pattern.permute.xlu0 0
    %268 = vperm.xlu0 %267, %v51
    %v269 = vpop.permute.xlu0 %268
    %272 = vset.pattern.permute.xlu0 0
    %273 = vperm.xlu0 %272, %v52
    %v274 = vpop.permute.xlu0 %273
    %277 = vset.pattern.permute.xlu0 0
    %278 = vperm.xlu0 %277, %v53
    %v279 = vpop.permute.xlu0 %278
    %282 = vset.pattern.permute.xlu0 0
    %283 = vperm.xlu0 %282, %v54
    %v284 = vpop.permute.xlu0 %283
    %287 = vset.pattern.permute.xlu0 0
    %288 = vperm.xlu0 %287, %v55
    %v289 = vpop.permute.xlu0 %288
    %292 = vset.pattern.permute.xlu0 0
    %293 = vperm.xlu0 %292, %v56
    %v294 = vpop.permute.xlu0 %293
    %297 = vset.pattern.permute.xlu0 0
    %298 = vperm.xlu0 %297, %v57
    %v299 = vpop.permute.xlu0 %298
    %302 = vset.pattern.permute.xlu0 0
    %303 = vperm.xlu0 %302, %v58
    %v304 = vpop.permute.xlu0 %303
    %307 = vset.pattern.permute.xlu0 0
    %308 = vperm.xlu0 %307, %v59
    %v309 = vpop.permute.xlu0 %308
    %312 = vset.pattern.permute.xlu0 0
    %313 = vperm.xlu0 %312, %v60
    %v314 = vpop.permute.xlu0 %313
    %317 = vset.pattern.permute.xlu0 0
    %318 = vperm.xlu0 %317, %v61
    %v319 = vpop.permute.xlu0 %318
    %322 = vset.pattern.permute.xlu0 0
    %323 = vperm.xlu0 %322, %v62
    %v324 = vpop.permute.xlu0 %323
    %327 = vset.pattern.permute.xlu0 0
    %328 = vperm.xlu0 %327, %v63
    %v329 = vpop.permute.xlu0 %328
    %332 = vset.pattern.permute.xlu0 0
    %333 = vperm.xlu0 %332, %v64
    %v334 = vpop.permute.xlu0 %333
    %337 = vset.pattern.permute.xlu0 0
    %338 = vperm.xlu0 %337, %v65
    %v339 = vpop.permute.xlu0 %338
    %342 = vset.pattern.permute.xlu0 0
    %343 = vperm.xlu0 %342, %v66
    %v344 = vpop.permute.xlu0 %343
    %347 = vset.pattern.permute.xlu0 0
    %348 = vperm.xlu0 %347, %v67
    %v349 = vpop.permute.xlu0 %348
    %352 = vset.pattern.permute.xlu0 0
    %353 = vperm.xlu0 %352, %v68
    %v354 = vpop.permute.xlu0 %353
    %357 = vset.pattern.permute.xlu0 0
    %358 = vperm.xlu0 %357, %v69
    %v359 = vpop.permute.xlu0 %358
    %362 = vset.pattern.permute.xlu0 0
    %363 = vperm.xlu0 %362, %v70
    %v364 = vpop.permute.xlu0 %363
    %367 = vset.pattern.permute.xlu0 0
    %368 = vperm.xlu0 %367, %v71
    %v369 = vpop.permute.xlu0 %368
    %372 = vset.pattern.permute.xlu0 0
    %373 = vperm.xlu0 %372, %v72
    %v374 = vpop.permute.xlu0 %373
    %377 = vset.pattern.permute.xlu0 0
    %378 = vperm.xlu0 %377, %v73
    %v379 = vpop.permute.xlu0 %378
    %382 = vset.pattern.permute.xlu0 0
    %383 = vperm.xlu0 %382, %v74
    %v384 = vpop.permute.xlu0 %383
    %387 = vset.pattern.permute.xlu0 0
    %388 = vperm.xlu0 %387, %v75
    %v389 = vpop.permute.xlu0 %388
    %392 = vset.pattern.permute.xlu0 0
    %393 = vperm.xlu0 %392, %v76
    %v394 = vpop.permute.xlu0 %393
    %397 = vset.pattern.permute.xlu0 0
    %398 = vperm.xlu0 %397, %v77
    %v399 = vpop.permute.xlu0 %398
    %402 = vset.pattern.permute.xlu0 0
    %403 = vperm.xlu0 %402, %v78
    %v404 = vpop.permute.xlu0 %403
    %407 = vset.pattern.permute.xlu0 0
    %408 = vperm.xlu0 %407, %v79
    %v409 = vpop.permute.xlu0 %408
    %412 = vset.pattern.permute.xlu0 0
    %413 = vperm.xlu0 %412, %v80
    %v414 = vpop.permute.xlu0 %413
    %417 = vset.pattern.permute.xlu0 0
    %418 = vperm.xlu0 %417, %v81
    %v419 = vpop.permute.xlu0 %418
    %v421 = vsub.f32 %v96, %v104
    %v422 = vsub.f32 %v100, %v104
    %v423 = vsub.f32 %v96, %v109
    %v424 = vsub.f32 %v100, %v109
    %v425 = vsub.f32 %v96, %v114
    %v426 = vsub.f32 %v100, %v114
    %v427 = vsub.f32 %v96, %v119
    %v428 = vsub.f32 %v100, %v119
    %v429 = vsub.f32 %v96, %v124
    %v430 = vsub.f32 %v100, %v124
    %v431 = vsub.f32 %v96, %v129
    %v432 = vsub.f32 %v100, %v129
    %v433 = vsub.f32 %v96, %v134
    %v434 = vsub.f32 %v100, %v134
    %v435 = vsub.f32 %v96, %v139
    %v436 = vsub.f32 %v100, %v139
    %v437 = vsub.f32 %v96, %v144
    %v438 = vsub.f32 %v100, %v144
    %v439 = vsub.f32 %v96, %v149
    %v440 = vsub.f32 %v100, %v149
    %v441 = vsub.f32 %v96, %v154
    %v442 = vsub.f32 %v100, %v154
    %v443 = vsub.f32 %v96, %v159
    %v444 = vsub.f32 %v100, %v159
    %v445 = vsub.f32 %v96, %v164
    %v446 = vsub.f32 %v100, %v164
    %v447 = vsub.f32 %v96, %v169
    %v448 = vsub.f32 %v100, %v169
    %v449 = vsub.f32 %v96, %v174
    %v450 = vsub.f32 %v100, %v174
    %v451 = vsub.f32 %v96, %v179
    %v452 = vsub.f32 %v100, %v179
    %v453 = vsub.f32 %v96, %v184
    %v454 = vsub.f32 %v100, %v184
    %v455 = vsub.f32 %v96, %v189
    %v456 = vsub.f32 %v100, %v189
    %v457 = vsub.f32 %v96, %v194
    %v458 = vsub.f32 %v100, %v194
    %v459 = vsub.f32 %v96, %v199
    %v460 = vsub.f32 %v100, %v199
    %v461 = vsub.f32 %v96, %v204
    %v462 = vsub.f32 %v100, %v204
    %v463 = vsub.f32 %v96, %v209
    %v464 = vsub.f32 %v100, %v209
    %v465 = vsub.f32 %v96, %v214
    %v466 = vsub.f32 %v100, %v214
    %v467 = vsub.f32 %v96, %v219
    %v468 = vsub.f32 %v100, %v219
    %v469 = vsub.f32 %v96, %v224
    %v470 = vsub.f32 %v100, %v224
    %v471 = vsub.f32 %v96, %v229
    %v472 = vsub.f32 %v100, %v229
    %v473 = vsub.f32 %v96, %v234
    %v474 = vsub.f32 %v100, %v234
    %v475 = vsub.f32 %v96, %v239
    %v476 = vsub.f32 %v100, %v239
    %v477 = vsub.f32 %v96, %v244
    %v478 = vsub.f32 %v100, %v244
    %v479 = vsub.f32 %v96, %v249
    %v480 = vsub.f32 %v100, %v249
    %v481 = vsub.f32 %v96, %v254
    %v482 = vsub.f32 %v100, %v254
    %v483 = vsub.f32 %v96, %v259
    %v484 = vsub.f32 %v100, %v259
    %v485 = vsub.f32 %v96, %v264
    %v486 = vsub.f32 %v100, %v264
    %v487 = vsub.f32 %v96, %v269
    %v488 = vsub.f32 %v100, %v269
    %v489 = vsub.f32 %v96, %v274
    %v490 = vsub.f32 %v100, %v274
    %v491 = vsub.f32 %v96, %v279
    %v492 = vsub.f32 %v100, %v279
    %v493 = vsub.f32 %v96, %v284
    %v494 = vsub.f32 %v100, %v284
    %v495 = vsub.f32 %v96, %v289
    %v496 = vsub.f32 %v100, %v289
    %v497 = vsub.f32 %v96, %v294
    %v498 = vsub.f32 %v100, %v294
    %v499 = vsub.f32 %v96, %v299
    %v500 = vsub.f32 %v100, %v299
    %v501 = vsub.f32 %v96, %v304
    %v502 = vsub.f32 %v100, %v304
    %v503 = vsub.f32 %v96, %v309
    %v504 = vsub.f32 %v100, %v309
    %v505 = vsub.f32 %v96, %v314
    %v506 = vsub.f32 %v100, %v314
    %v507 = vsub.f32 %v96, %v319
    %v508 = vsub.f32 %v100, %v319
    %v509 = vsub.f32 %v96, %v324
    %v510 = vsub.f32 %v100, %v324
    %v511 = vsub.f32 %v96, %v329
    %v512 = vsub.f32 %v100, %v329
    %v513 = vsub.f32 %v96, %v334
    %v514 = vsub.f32 %v100, %v334
    %v515 = vsub.f32 %v96, %v339
    %v516 = vsub.f32 %v100, %v339
    %v517 = vsub.f32 %v96, %v344
    %v518 = vsub.f32 %v100, %v344
    %v519 = vsub.f32 %v96, %v349
    %v520 = vsub.f32 %v100, %v349
    %v521 = vsub.f32 %v96, %v354
    %v522 = vsub.f32 %v100, %v354
    %v523 = vsub.f32 %v96, %v359
    %v524 = vsub.f32 %v100, %v359
    %v525 = vsub.f32 %v96, %v364
    %v526 = vsub.f32 %v100, %v364
    %v527 = vsub.f32 %v96, %v369
    %v528 = vsub.f32 %v100, %v369
    %v529 = vsub.f32 %v96, %v374
    %v530 = vsub.f32 %v100, %v374
    %v531 = vsub.f32 %v96, %v379
    %v532 = vsub.f32 %v100, %v379
    %v533 = vsub.f32 %v96, %v384
    %v534 = vsub.f32 %v100, %v384
    %v535 = vsub.f32 %v96, %v389
    %v536 = vsub.f32 %v100, %v389
    %v537 = vsub.f32 %v96, %v394
    %v538 = vsub.f32 %v100, %v394
    %v539 = vsub.f32 %v96, %v399
    %v540 = vsub.f32 %v100, %v399
    %v541 = vsub.f32 %v96, %v404
    %v542 = vsub.f32 %v100, %v404
    %v543 = vsub.f32 %v96, %v409
    %v544 = vsub.f32 %v100, %v409
    %v545 = vsub.f32 %v96, %v414
    %v546 = vsub.f32 %v100, %v414
    %v547 = vsub.f32 %v96, %v419
    %v548 = vsub.f32 %v100, %v419
    %v549 = vand.u32 2147483647, %v421
    %v550 = vand.u32 2147483647, %v422
    %v551 = vand.u32 2147483647, %v423
    %v552 = vand.u32 2147483647, %v424
    %v553 = vand.u32 2147483647, %v425
    %v554 = vand.u32 2147483647, %v426
    %v555 = vand.u32 2147483647, %v427
    %v556 = vand.u32 2147483647, %v428
    %v557 = vand.u32 2147483647, %v429
    %v558 = vand.u32 2147483647, %v430
    %v559 = vand.u32 2147483647, %v431
    %v560 = vand.u32 2147483647, %v432
    %v561 = vand.u32 2147483647, %v433
    %v562 = vand.u32 2147483647, %v434
    %v563 = vand.u32 2147483647, %v435
    %v564 = vand.u32 2147483647, %v436
    %v565 = vand.u32 2147483647, %v437
    %v566 = vand.u32 2147483647, %v438
    %v567 = vand.u32 2147483647, %v439
    %v568 = vand.u32 2147483647, %v440
    %v569 = vand.u32 2147483647, %v441
    %v570 = vand.u32 2147483647, %v442
    %v571 = vand.u32 2147483647, %v443
    %v572 = vand.u32 2147483647, %v444
    %v573 = vand.u32 2147483647, %v445
    %v574 = vand.u32 2147483647, %v446
    %v575 = vand.u32 2147483647, %v447
    %v576 = vand.u32 2147483647, %v448
    %v577 = vand.u32 2147483647, %v449
    %v578 = vand.u32 2147483647, %v450
    %v579 = vand.u32 2147483647, %v451
    %v580 = vand.u32 2147483647, %v452
    %v581 = vand.u32 2147483647, %v453
    %v582 = vand.u32 2147483647, %v454
    %v583 = vand.u32 2147483647, %v455
    %v584 = vand.u32 2147483647, %v456
    %v585 = vand.u32 2147483647, %v457
    %v586 = vand.u32 2147483647, %v458
    %v587 = vand.u32 2147483647, %v459
    %v588 = vand.u32 2147483647, %v460
    %v589 = vand.u32 2147483647, %v461
    %v590 = vand.u32 2147483647, %v462
    %v591 = vand.u32 2147483647, %v463
    %v592 = vand.u32 2147483647, %v464
    %v593 = vand.u32 2147483647, %v465
    %v594 = vand.u32 2147483647, %v466
    %v595 = vand.u32 2147483647, %v467
    %v596 = vand.u32 2147483647, %v468
    %v597 = vand.u32 2147483647, %v469
    %v598 = vand.u32 2147483647, %v470
    %v599 = vand.u32 2147483647, %v471
    %v600 = vand.u32 2147483647, %v472
    %v601 = vand.u32 2147483647, %v473
    %v602 = vand.u32 2147483647, %v474
    %v603 = vand.u32 2147483647, %v475
    %v604 = vand.u32 2147483647, %v476
    %v605 = vand.u32 2147483647, %v477
    %v606 = vand.u32 2147483647, %v478
    %v607 = vand.u32 2147483647, %v479
    %v608 = vand.u32 2147483647, %v480
    %v609 = vand.u32 2147483647, %v481
    %v610 = vand.u32 2147483647, %v482
    %v611 = vand.u32 2147483647, %v483
    %v612 = vand.u32 2147483647, %v484
    %v613 = vand.u32 2147483647, %v485
    %v614 = vand.u32 2147483647, %v486
    %v615 = vand.u32 2147483647, %v487
    %v616 = vand.u32 2147483647, %v488
    %v617 = vand.u32 2147483647, %v489
    %v618 = vand.u32 2147483647, %v490
    %v619 = vand.u32 2147483647, %v491
    %v620 = vand.u32 2147483647, %v492
    %v621 = vand.u32 2147483647, %v493
    %v622 = vand.u32 2147483647, %v494
    %v623 = vand.u32 2147483647, %v495
    %v624 = vand.u32 2147483647, %v496
    %v625 = vand.u32 2147483647, %v497
    %v626 = vand.u32 2147483647, %v498
    %v627 = vand.u32 2147483647, %v499
    %v628 = vand.u32 2147483647, %v500
    %v629 = vand.u32 2147483647, %v501
    %v630 = vand.u32 2147483647, %v502
    %v631 = vand.u32 2147483647, %v503
    %v632 = vand.u32 2147483647, %v504
    %v633 = vand.u32 2147483647, %v505
    %v634 = vand.u32 2147483647, %v506
    %v635 = vand.u32 2147483647, %v507
    %v636 = vand.u32 2147483647, %v508
    %v637 = vand.u32 2147483647, %v509
    %v638 = vand.u32 2147483647, %v510
    %v639 = vand.u32 2147483647, %v511
    %v640 = vand.u32 2147483647, %v512
    %v641 = vand.u32 2147483647, %v513
    %v642 = vand.u32 2147483647, %v514
    %v643 = vand.u32 2147483647, %v515
    %v644 = vand.u32 2147483647, %v516
    %v645 = vand.u32 2147483647, %v517
    %v646 = vand.u32 2147483647, %v518
    %v647 = vand.u32 2147483647, %v519
    %v648 = vand.u32 2147483647, %v520
    %v649 = vand.u32 2147483647, %v521
    %v650 = vand.u32 2147483647, %v522
    %v651 = vand.u32 2147483647, %v523
    %v652 = vand.u32 2147483647, %v524
    %v653 = vand.u32 2147483647, %v525
    %v654 = vand.u32 2147483647, %v526
    %v655 = vand.u32 2147483647, %v527
    %v656 = vand.u32 2147483647, %v528
    %v657 = vand.u32 2147483647, %v529
    %v658 = vand.u32 2147483647, %v530
    %v659 = vand.u32 2147483647, %v531
    %v660 = vand.u32 2147483647, %v532
    %v661 = vand.u32 2147483647, %v533
    %v662 = vand.u32 2147483647, %v534
    %v663 = vand.u32 2147483647, %v535
    %v664 = vand.u32 2147483647, %v536
    %v665 = vand.u32 2147483647, %v537
    %v666 = vand.u32 2147483647, %v538
    %v667 = vand.u32 2147483647, %v539
    %v668 = vand.u32 2147483647, %v540
    %v669 = vand.u32 2147483647, %v541
    %v670 = vand.u32 2147483647, %v542
    %v671 = vand.u32 2147483647, %v543
    %v672 = vand.u32 2147483647, %v544
    %v673 = vand.u32 2147483647, %v545
    %v674 = vand.u32 2147483647, %v546
    %v675 = vand.u32 2147483647, %v547
    %v676 = vand.u32 2147483647, %v548
    %v677 = vsub.f32 1.0, %v549
    %v678 = vsub.f32 1.0, %v550
    %v679 = vsub.f32 1.0, %v551
    %v680 = vsub.f32 1.0, %v552
    %v681 = vsub.f32 1.0, %v553
    %v682 = vsub.f32 1.0, %v554
    %v683 = vsub.f32 1.0, %v555
    %v684 = vsub.f32 1.0, %v556
    %v685 = vsub.f32 1.0, %v557
    %v686 = vsub.f32 1.0, %v558
    %v687 = vsub.f32 1.0, %v559
    %v688 = vsub.f32 1.0, %v560
    %v689 = vsub.f32 1.0, %v561
    %v690 = vsub.f32 1.0, %v562
    %v691 = vsub.f32 1.0, %v563
    %v692 = vsub.f32 1.0, %v564
    %v693 = vsub.f32 1.0, %v565
    %v694 = vsub.f32 1.0, %v566
    %v695 = vsub.f32 1.0, %v567
    %v696 = vsub.f32 1.0, %v568
    %v697 = vsub.f32 1.0, %v569
    %v698 = vsub.f32 1.0, %v570
    %v699 = vsub.f32 1.0, %v571
    %v700 = vsub.f32 1.0, %v572
    %v701 = vsub.f32 1.0, %v573
    %v702 = vsub.f32 1.0, %v574
    %v703 = vsub.f32 1.0, %v575
    %v704 = vsub.f32 1.0, %v576
    %v705 = vsub.f32 1.0, %v577
    %v706 = vsub.f32 1.0, %v578
    %v707 = vsub.f32 1.0, %v579
    %v708 = vsub.f32 1.0, %v580
    %v709 = vsub.f32 1.0, %v581
    %v710 = vsub.f32 1.0, %v582
    %v711 = vsub.f32 1.0, %v583
    %v712 = vsub.f32 1.0, %v584
    %v713 = vsub.f32 1.0, %v585
    %v714 = vsub.f32 1.0, %v586
    %v715 = vsub.f32 1.0, %v587
    %v716 = vsub.f32 1.0, %v588
    %v717 = vsub.f32 1.0, %v589
    %v718 = vsub.f32 1.0, %v590
    %v719 = vsub.f32 1.0, %v591
    %v720 = vsub.f32 1.0, %v592
    %v721 = vsub.f32 1.0, %v593
    %v722 = vsub.f32 1.0, %v594
    %v723 = vsub.f32 1.0, %v595
    %v724 = vsub.f32 1.0, %v596
    %v725 = vsub.f32 1.0, %v597
    %v726 = vsub.f32 1.0, %v598
    %v727 = vsub.f32 1.0, %v599
    %v728 = vsub.f32 1.0, %v600
    %v729 = vsub.f32 1.0, %v601
    %v730 = vsub.f32 1.0, %v602
    %v731 = vsub.f32 1.0, %v603
    %v732 = vsub.f32 1.0, %v604
    %v733 = vsub.f32 1.0, %v605
    %v734 = vsub.f32 1.0, %v606
    %v735 = vsub.f32 1.0, %v607
    %v736 = vsub.f32 1.0, %v608
    %v737 = vsub.f32 1.0, %v609
    %v738 = vsub.f32 1.0, %v610
    %v739 = vsub.f32 1.0, %v611
    %v740 = vsub.f32 1.0, %v612
    %v741 = vsub.f32 1.0, %v613
    %v742 = vsub.f32 1.0, %v614
    %v743 = vsub.f32 1.0, %v615
    %v744 = vsub.f32 1.0, %v616
    %v745 = vsub.f32 1.0, %v617
    %v746 = vsub.f32 1.0, %v618
    %v747 = vsub.f32 1.0, %v619
    %v748 = vsub.f32 1.0, %v620
    %v749 = vsub.f32 1.0, %v621
    %v750 = vsub.f32 1.0, %v622
    %v751 = vsub.f32 1.0, %v623
    %v752 = vsub.f32 1.0, %v624
    %v753 = vsub.f32 1.0, %v625
    %v754 = vsub.f32 1.0, %v626
    %v755 = vsub.f32 1.0, %v627
    %v756 = vsub.f32 1.0, %v628
    %v757 = vsub.f32 1.0, %v629
    %v758 = vsub.f32 1.0, %v630
    %v759 = vsub.f32 1.0, %v631
    %v760 = vsub.f32 1.0, %v632
    %v761 = vsub.f32 1.0, %v633
    %v762 = vsub.f32 1.0, %v634
    %v763 = vsub.f32 1.0, %v635
    %v764 = vsub.f32 1.0, %v636
    %v765 = vsub.f32 1.0, %v637
    %v766 = vsub.f32 1.0, %v638
    %v767 = vsub.f32 1.0, %v639
    %v768 = vsub.f32 1.0, %v640
    %v769 = vsub.f32 1.0, %v641
    %v770 = vsub.f32 1.0, %v642
    %v771 = vsub.f32 1.0, %v643
    %v772 = vsub.f32 1.0, %v644
    %v773 = vsub.f32 1.0, %v645
    %v774 = vsub.f32 1.0, %v646
    %v775 = vsub.f32 1.0, %v647
    %v776 = vsub.f32 1.0, %v648
    %v777 = vsub.f32 1.0, %v649
    %v778 = vsub.f32 1.0, %v650
    %v779 = vsub.f32 1.0, %v651
    %v780 = vsub.f32 1.0, %v652
    %v781 = vsub.f32 1.0, %v653
    %v782 = vsub.f32 1.0, %v654
    %v783 = vsub.f32 1.0, %v655
    %v784 = vsub.f32 1.0, %v656
    %v785 = vsub.f32 1.0, %v657
    %v786 = vsub.f32 1.0, %v658
    %v787 = vsub.f32 1.0, %v659
    %v788 = vsub.f32 1.0, %v660
    %v789 = vsub.f32 1.0, %v661
    %v790 = vsub.f32 1.0, %v662
    %v791 = vsub.f32 1.0, %v663
    %v792 = vsub.f32 1.0, %v664
    %v793 = vsub.f32 1.0, %v665
    %v794 = vsub.f32 1.0, %v666
    %v795 = vsub.f32 1.0, %v667
    %v796 = vsub.f32 1.0, %v668
    %v797 = vsub.f32 1.0, %v669
    %v798 = vsub.f32 1.0, %v670
    %v799 = vsub.f32 1.0, %v671
    %v800 = vsub.f32 1.0, %v672
    %v801 = vsub.f32 1.0, %v673
    %v802 = vsub.f32 1.0, %v674
    %v803 = vsub.f32 1.0, %v675
    %v804 = vsub.f32 1.0, %v676
    %v805 = vmax.f32 %v677, 0.0
    %v806 = vmax.f32 %v678, 0.0
    %v807 = vmax.f32 %v679, 0.0
    %v808 = vmax.f32 %v680, 0.0
    %v809 = vmax.f32 %v681, 0.0
    %v810 = vmax.f32 %v682, 0.0
    %v811 = vmax.f32 %v683, 0.0
    %v812 = vmax.f32 %v684, 0.0
    %v813 = vmax.f32 %v685, 0.0
    %v814 = vmax.f32 %v686, 0.0
    %v815 = vmax.f32 %v687, 0.0
    %v816 = vmax.f32 %v688, 0.0
    %v817 = vmax.f32 %v689, 0.0
    %v818 = vmax.f32 %v690, 0.0
    %v819 = vmax.f32 %v691, 0.0
    %v820 = vmax.f32 %v692, 0.0
    %v821 = vmax.f32 %v693, 0.0
    %v822 = vmax.f32 %v694, 0.0
    %v823 = vmax.f32 %v695, 0.0
    %v824 = vmax.f32 %v696, 0.0
    %v825 = vmax.f32 %v697, 0.0
    %v826 = vmax.f32 %v698, 0.0
    %v827 = vmax.f32 %v699, 0.0
    %v828 = vmax.f32 %v700, 0.0
    %v829 = vmax.f32 %v701, 0.0
    %v830 = vmax.f32 %v702, 0.0
    %v831 = vmax.f32 %v703, 0.0
    %v832 = vmax.f32 %v704, 0.0
    %v833 = vmax.f32 %v705, 0.0
    %v834 = vmax.f32 %v706, 0.0
    %v835 = vmax.f32 %v707, 0.0
    %v836 = vmax.f32 %v708, 0.0
    %v837 = vmax.f32 %v709, 0.0
    %v838 = vmax.f32 %v710, 0.0
    %v839 = vmax.f32 %v711, 0.0
    %v840 = vmax.f32 %v712, 0.0
    %v841 = vmax.f32 %v713, 0.0
    %v842 = vmax.f32 %v714, 0.0
    %v843 = vmax.f32 %v715, 0.0
    %v844 = vmax.f32 %v716, 0.0
    %v845 = vmax.f32 %v717, 0.0
    %v846 = vmax.f32 %v718, 0.0
    %v847 = vmax.f32 %v719, 0.0
    %v848 = vmax.f32 %v720, 0.0
    %v849 = vmax.f32 %v721, 0.0
    %v850 = vmax.f32 %v722, 0.0
    %v851 = vmax.f32 %v723, 0.0
    %v852 = vmax.f32 %v724, 0.0
    %v853 = vmax.f32 %v725, 0.0
    %v854 = vmax.f32 %v726, 0.0
    %v855 = vmax.f32 %v727, 0.0
    %v856 = vmax.f32 %v728, 0.0
    %v857 = vmax.f32 %v729, 0.0
    %v858 = vmax.f32 %v730, 0.0
    %v859 = vmax.f32 %v731, 0.0
    %v860 = vmax.f32 %v732, 0.0
    %v861 = vmax.f32 %v733, 0.0
    %v862 = vmax.f32 %v734, 0.0
    %v863 = vmax.f32 %v735, 0.0
    %v864 = vmax.f32 %v736, 0.0
    %v865 = vmax.f32 %v737, 0.0
    %v866 = vmax.f32 %v738, 0.0
    %v867 = vmax.f32 %v739, 0.0
    %v868 = vmax.f32 %v740, 0.0
    %v869 = vmax.f32 %v741, 0.0
    %v870 = vmax.f32 %v742, 0.0
    %v871 = vmax.f32 %v743, 0.0
    %v872 = vmax.f32 %v744, 0.0
    %v873 = vmax.f32 %v745, 0.0
    %v874 = vmax.f32 %v746, 0.0
    %v875 = vmax.f32 %v747, 0.0
    %v876 = vmax.f32 %v748, 0.0
    %v877 = vmax.f32 %v749, 0.0
    %v878 = vmax.f32 %v750, 0.0
    %v879 = vmax.f32 %v751, 0.0
    %v880 = vmax.f32 %v752, 0.0
    %v881 = vmax.f32 %v753, 0.0
    %v882 = vmax.f32 %v754, 0.0
    %v883 = vmax.f32 %v755, 0.0
    %v884 = vmax.f32 %v756, 0.0
    %v885 = vmax.f32 %v757, 0.0
    %v886 = vmax.f32 %v758, 0.0
    %v887 = vmax.f32 %v759, 0.0
    %v888 = vmax.f32 %v760, 0.0
    %v889 = vmax.f32 %v761, 0.0
    %v890 = vmax.f32 %v762, 0.0
    %v891 = vmax.f32 %v763, 0.0
    %v892 = vmax.f32 %v764, 0.0
    %v893 = vmax.f32 %v765, 0.0
    %v894 = vmax.f32 %v766, 0.0
    %v895 = vmax.f32 %v767, 0.0
    %v896 = vmax.f32 %v768, 0.0
    %v897 = vmax.f32 %v769, 0.0
    %v898 = vmax.f32 %v770, 0.0
    %v899 = vmax.f32 %v771, 0.0
    %v900 = vmax.f32 %v772, 0.0
    %v901 = vmax.f32 %v773, 0.0
    %v902 = vmax.f32 %v774, 0.0
    %v903 = vmax.f32 %v775, 0.0
    %v904 = vmax.f32 %v776, 0.0
    %v905 = vmax.f32 %v777, 0.0
    %v906 = vmax.f32 %v778, 0.0
    %v907 = vmax.f32 %v779, 0.0
    %v908 = vmax.f32 %v780, 0.0
    %v909 = vmax.f32 %v781, 0.0
    %v910 = vmax.f32 %v782, 0.0
    %v911 = vmax.f32 %v783, 0.0
    %v912 = vmax.f32 %v784, 0.0
    %v913 = vmax.f32 %v785, 0.0
    %v914 = vmax.f32 %v786, 0.0
    %v915 = vmax.f32 %v787, 0.0
    %v916 = vmax.f32 %v788, 0.0
    %v917 = vmax.f32 %v789, 0.0
    %v918 = vmax.f32 %v790, 0.0
    %v919 = vmax.f32 %v791, 0.0
    %v920 = vmax.f32 %v792, 0.0
    %v921 = vmax.f32 %v793, 0.0
    %v922 = vmax.f32 %v794, 0.0
    %v923 = vmax.f32 %v795, 0.0
    %v924 = vmax.f32 %v796, 0.0
    %v925 = vmax.f32 %v797, 0.0
    %v926 = vmax.f32 %v798, 0.0
    %v927 = vmax.f32 %v799, 0.0
    %v928 = vmax.f32 %v800, 0.0
    %v929 = vmax.f32 %v801, 0.0
    %v930 = vmax.f32 %v802, 0.0
    %v931 = vmax.f32 %v803, 0.0
    %v932 = vmax.f32 %v804, 0.0
    %v933 = vlaneseq
    %v934 = vshrl.u32 %v933, 7
    %v935 = vsub.s32 1, %v934
    %v936 = vrot.slane %v17, %v935
    %v937 = vlaneseq
    %v938 = vshrl.u32 %v937, 7
    %v939 = vsub.s32 5, %v938
    %v940 = vrot.slane %v17, %v939
    %v943 = vlaneseq
    %v944 = vshrl.u32 %v943, 7
    %v945 = vsub.s32 1, %v944
    %v946 = vrot.slane %v936, %v945
    %v947 = vlaneseq
    %v948 = vshrl.u32 %v947, 7
    %v949 = vsub.s32 1, %v948
    %v950 = vrot.slane %v940, %v949
    %951 = vset.pattern.permute.xlu0 1
    %952 = vperm.xlu0 %951, %v18
    %v953 = vpop.permute.xlu0 %952
    %955 = vset.pattern.permute.xlu0 1
    %956 = vperm.xlu0 %955, %v19
    %v957 = vpop.permute.xlu0 %956
    %959 = vset.pattern.permute.xlu0 1
    %960 = vperm.xlu0 %959, %v20
    %v961 = vpop.permute.xlu0 %960
    %963 = vset.pattern.permute.xlu0 1
    %964 = vperm.xlu0 %963, %v21
    %v965 = vpop.permute.xlu0 %964
    %967 = vset.pattern.permute.xlu0 1
    %968 = vperm.xlu0 %967, %v22
    %v969 = vpop.permute.xlu0 %968
    %971 = vset.pattern.permute.xlu0 1
    %972 = vperm.xlu0 %971, %v23
    %v973 = vpop.permute.xlu0 %972
    %975 = vset.pattern.permute.xlu0 1
    %976 = vperm.xlu0 %975, %v24
    %v977 = vpop.permute.xlu0 %976
    %979 = vset.pattern.permute.xlu0 1
    %980 = vperm.xlu0 %979, %v25
    %v981 = vpop.permute.xlu0 %980
    %983 = vset.pattern.permute.xlu0 1
    %984 = vperm.xlu0 %983, %v26
    %v985 = vpop.permute.xlu0 %984
    %987 = vset.pattern.permute.xlu0 1
    %988 = vperm.xlu0 %987, %v27
    %v989 = vpop.permute.xlu0 %988
    %991 = vset.pattern.permute.xlu0 1
    %992 = vperm.xlu0 %991, %v28
    %v993 = vpop.permute.xlu0 %992
    %995 = vset.pattern.permute.xlu0 1
    %996 = vperm.xlu0 %995, %v29
    %v997 = vpop.permute.xlu0 %996
    %999 = vset.pattern.permute.xlu0 1
    %1000 = vperm.xlu0 %999, %v30
    %v1001 = vpop.permute.xlu0 %1000
    %1003 = vset.pattern.permute.xlu0 1
    %1004 = vperm.xlu0 %1003, %v31
    %v1005 = vpop.permute.xlu0 %1004
    %1007 = vset.pattern.permute.xlu0 1
    %1008 = vperm.xlu0 %1007, %v32
    %v1009 = vpop.permute.xlu0 %1008
    %1011 = vset.pattern.permute.xlu0 1
    %1012 = vperm.xlu0 %1011, %v33
    %v1013 = vpop.permute.xlu0 %1012
    %1015 = vset.pattern.permute.xlu0 1
    %1016 = vperm.xlu0 %1015, %v34
    %v1017 = vpop.permute.xlu0 %1016
    %1019 = vset.pattern.permute.xlu0 1
    %1020 = vperm.xlu0 %1019, %v35
    %v1021 = vpop.permute.xlu0 %1020
    %1023 = vset.pattern.permute.xlu0 1
    %1024 = vperm.xlu0 %1023, %v36
    %v1025 = vpop.permute.xlu0 %1024
    %1027 = vset.pattern.permute.xlu0 1
    %1028 = vperm.xlu0 %1027, %v37
    %v1029 = vpop.permute.xlu0 %1028
    %1031 = vset.pattern.permute.xlu0 1
    %1032 = vperm.xlu0 %1031, %v38
    %v1033 = vpop.permute.xlu0 %1032
    %1035 = vset.pattern.permute.xlu0 1
    %1036 = vperm.xlu0 %1035, %v39
    %v1037 = vpop.permute.xlu0 %1036
    %1039 = vset.pattern.permute.xlu0 1
    %1040 = vperm.xlu0 %1039, %v40
    %v1041 = vpop.permute.xlu0 %1040
    %1043 = vset.pattern.permute.xlu0 1
    %1044 = vperm.xlu0 %1043, %v41
    %v1045 = vpop.permute.xlu0 %1044
    %1047 = vset.pattern.permute.xlu0 1
    %1048 = vperm.xlu0 %1047, %v42
    %v1049 = vpop.permute.xlu0 %1048
    %1051 = vset.pattern.permute.xlu0 1
    %1052 = vperm.xlu0 %1051, %v43
    %v1053 = vpop.permute.xlu0 %1052
    %1055 = vset.pattern.permute.xlu0 1
    %1056 = vperm.xlu0 %1055, %v44
    %v1057 = vpop.permute.xlu0 %1056
    %1059 = vset.pattern.permute.xlu0 1
    %1060 = vperm.xlu0 %1059, %v45
    %v1061 = vpop.permute.xlu0 %1060
    %1063 = vset.pattern.permute.xlu0 1
    %1064 = vperm.xlu0 %1063, %v46
    %v1065 = vpop.permute.xlu0 %1064
    %1067 = vset.pattern.permute.xlu0 1
    %1068 = vperm.xlu0 %1067, %v47
    %v1069 = vpop.permute.xlu0 %1068
    %1071 = vset.pattern.permute.xlu0 1
    %1072 = vperm.xlu0 %1071, %v48
    %v1073 = vpop.permute.xlu0 %1072
    %1075 = vset.pattern.permute.xlu0 1
    %1076 = vperm.xlu0 %1075, %v49
    %v1077 = vpop.permute.xlu0 %1076
    %1079 = vset.pattern.permute.xlu0 1
    %1080 = vperm.xlu0 %1079, %v50
    %v1081 = vpop.permute.xlu0 %1080
    %1083 = vset.pattern.permute.xlu0 1
    %1084 = vperm.xlu0 %1083, %v51
    %v1085 = vpop.permute.xlu0 %1084
    %1087 = vset.pattern.permute.xlu0 1
    %1088 = vperm.xlu0 %1087, %v52
    %v1089 = vpop.permute.xlu0 %1088
    %1091 = vset.pattern.permute.xlu0 1
    %1092 = vperm.xlu0 %1091, %v53
    %v1093 = vpop.permute.xlu0 %1092
    %1095 = vset.pattern.permute.xlu0 1
    %1096 = vperm.xlu0 %1095, %v54
    %v1097 = vpop.permute.xlu0 %1096
    %1099 = vset.pattern.permute.xlu0 1
    %1100 = vperm.xlu0 %1099, %v55
    %v1101 = vpop.permute.xlu0 %1100
    %1103 = vset.pattern.permute.xlu0 1
    %1104 = vperm.xlu0 %1103, %v56
    %v1105 = vpop.permute.xlu0 %1104
    %1107 = vset.pattern.permute.xlu0 1
    %1108 = vperm.xlu0 %1107, %v57
    %v1109 = vpop.permute.xlu0 %1108
    %1111 = vset.pattern.permute.xlu0 1
    %1112 = vperm.xlu0 %1111, %v58
    %v1113 = vpop.permute.xlu0 %1112
    %1115 = vset.pattern.permute.xlu0 1
    %1116 = vperm.xlu0 %1115, %v59
    %v1117 = vpop.permute.xlu0 %1116
    %1119 = vset.pattern.permute.xlu0 1
    %1120 = vperm.xlu0 %1119, %v60
    %v1121 = vpop.permute.xlu0 %1120
    %1123 = vset.pattern.permute.xlu0 1
    %1124 = vperm.xlu0 %1123, %v61
    %v1125 = vpop.permute.xlu0 %1124
    %1127 = vset.pattern.permute.xlu0 1
    %1128 = vperm.xlu0 %1127, %v62
    %v1129 = vpop.permute.xlu0 %1128
    %1131 = vset.pattern.permute.xlu0 1
    %1132 = vperm.xlu0 %1131, %v63
    %v1133 = vpop.permute.xlu0 %1132
    %1135 = vset.pattern.permute.xlu0 1
    %1136 = vperm.xlu0 %1135, %v64
    %v1137 = vpop.permute.xlu0 %1136
    %1139 = vset.pattern.permute.xlu0 1
    %1140 = vperm.xlu0 %1139, %v65
    %v1141 = vpop.permute.xlu0 %1140
    %1143 = vset.pattern.permute.xlu0 1
    %1144 = vperm.xlu0 %1143, %v66
    %v1145 = vpop.permute.xlu0 %1144
    %1147 = vset.pattern.permute.xlu0 1
    %1148 = vperm.xlu0 %1147, %v67
    %v1149 = vpop.permute.xlu0 %1148
    %1151 = vset.pattern.permute.xlu0 1
    %1152 = vperm.xlu0 %1151, %v68
    %v1153 = vpop.permute.xlu0 %1152
    %1155 = vset.pattern.permute.xlu0 1
    %1156 = vperm.xlu0 %1155, %v69
    %v1157 = vpop.permute.xlu0 %1156
    %1159 = vset.pattern.permute.xlu0 1
    %1160 = vperm.xlu0 %1159, %v70
    %v1161 = vpop.permute.xlu0 %1160
    %1163 = vset.pattern.permute.xlu0 1
    %1164 = vperm.xlu0 %1163, %v71
    %v1165 = vpop.permute.xlu0 %1164
    %1167 = vset.pattern.permute.xlu0 1
    %1168 = vperm.xlu0 %1167, %v72
    %v1169 = vpop.permute.xlu0 %1168
    %1171 = vset.pattern.permute.xlu0 1
    %1172 = vperm.xlu0 %1171, %v73
    %v1173 = vpop.permute.xlu0 %1172
    %1175 = vset.pattern.permute.xlu0 1
    %1176 = vperm.xlu0 %1175, %v74
    %v1177 = vpop.permute.xlu0 %1176
    %1179 = vset.pattern.permute.xlu0 1
    %1180 = vperm.xlu0 %1179, %v75
    %v1181 = vpop.permute.xlu0 %1180
    %1183 = vset.pattern.permute.xlu0 1
    %1184 = vperm.xlu0 %1183, %v76
    %v1185 = vpop.permute.xlu0 %1184
    %1187 = vset.pattern.permute.xlu0 1
    %1188 = vperm.xlu0 %1187, %v77
    %v1189 = vpop.permute.xlu0 %1188
    %1191 = vset.pattern.permute.xlu0 1
    %1192 = vperm.xlu0 %1191, %v78
    %v1193 = vpop.permute.xlu0 %1192
    %1195 = vset.pattern.permute.xlu0 1
    %1196 = vperm.xlu0 %1195, %v79
    %v1197 = vpop.permute.xlu0 %1196
    %1199 = vset.pattern.permute.xlu0 1
    %1200 = vperm.xlu0 %1199, %v80
    %v1201 = vpop.permute.xlu0 %1200
    %1203 = vset.pattern.permute.xlu0 1
    %1204 = vperm.xlu0 %1203, %v81
    %v1205 = vpop.permute.xlu0 %1204
    %v1207 = vsub.f32 %v946, %v953
    %v1208 = vsub.f32 %v950, %v953
    %v1209 = vsub.f32 %v946, %v957
    %v1210 = vsub.f32 %v950, %v957
    %v1211 = vsub.f32 %v946, %v961
    %v1212 = vsub.f32 %v950, %v961
    %v1213 = vsub.f32 %v946, %v965
    %v1214 = vsub.f32 %v950, %v965
    %v1215 = vsub.f32 %v946, %v969
    %v1216 = vsub.f32 %v950, %v969
    %v1217 = vsub.f32 %v946, %v973
    %v1218 = vsub.f32 %v950, %v973
    %v1219 = vsub.f32 %v946, %v977
    %v1220 = vsub.f32 %v950, %v977
    %v1221 = vsub.f32 %v946, %v981
    %v1222 = vsub.f32 %v950, %v981
    %v1223 = vsub.f32 %v946, %v985
    %v1224 = vsub.f32 %v950, %v985
    %v1225 = vsub.f32 %v946, %v989
    %v1226 = vsub.f32 %v950, %v989
    %v1227 = vsub.f32 %v946, %v993
    %v1228 = vsub.f32 %v950, %v993
    %v1229 = vsub.f32 %v946, %v997
    %v1230 = vsub.f32 %v950, %v997
    %v1231 = vsub.f32 %v946, %v1001
    %v1232 = vsub.f32 %v950, %v1001
    %v1233 = vsub.f32 %v946, %v1005
    %v1234 = vsub.f32 %v950, %v1005
    %v1235 = vsub.f32 %v946, %v1009
    %v1236 = vsub.f32 %v950, %v1009
    %v1237 = vsub.f32 %v946, %v1013
    %v1238 = vsub.f32 %v950, %v1013
    %v1239 = vsub.f32 %v946, %v1017
    %v1240 = vsub.f32 %v950, %v1017
    %v1241 = vsub.f32 %v946, %v1021
    %v1242 = vsub.f32 %v950, %v1021
    %v1243 = vsub.f32 %v946, %v1025
    %v1244 = vsub.f32 %v950, %v1025
    %v1245 = vsub.f32 %v946, %v1029
    %v1246 = vsub.f32 %v950, %v1029
    %v1247 = vsub.f32 %v946, %v1033
    %v1248 = vsub.f32 %v950, %v1033
    %v1249 = vsub.f32 %v946, %v1037
    %v1250 = vsub.f32 %v950, %v1037
    %v1251 = vsub.f32 %v946, %v1041
    %v1252 = vsub.f32 %v950, %v1041
    %v1253 = vsub.f32 %v946, %v1045
    %v1254 = vsub.f32 %v950, %v1045
    %v1255 = vsub.f32 %v946, %v1049
    %v1256 = vsub.f32 %v950, %v1049
    %v1257 = vsub.f32 %v946, %v1053
    %v1258 = vsub.f32 %v950, %v1053
    %v1259 = vsub.f32 %v946, %v1057
    %v1260 = vsub.f32 %v950, %v1057
    %v1261 = vsub.f32 %v946, %v1061
    %v1262 = vsub.f32 %v950, %v1061
    %v1263 = vsub.f32 %v946, %v1065
    %v1264 = vsub.f32 %v950, %v1065
    %v1265 = vsub.f32 %v946, %v1069
    %v1266 = vsub.f32 %v950, %v1069
    %v1267 = vsub.f32 %v946, %v1073
    %v1268 = vsub.f32 %v950, %v1073
    %v1269 = vsub.f32 %v946, %v1077
    %v1270 = vsub.f32 %v950, %v1077
    %v1271 = vsub.f32 %v946, %v1081
    %v1272 = vsub.f32 %v950, %v1081
    %v1273 = vsub.f32 %v946, %v1085
    %v1274 = vsub.f32 %v950, %v1085
    %v1275 = vsub.f32 %v946, %v1089
    %v1276 = vsub.f32 %v950, %v1089
    %v1277 = vsub.f32 %v946, %v1093
    %v1278 = vsub.f32 %v950, %v1093
    %v1279 = vsub.f32 %v946, %v1097
    %v1280 = vsub.f32 %v950, %v1097
    %v1281 = vsub.f32 %v946, %v1101
    %v1282 = vsub.f32 %v950, %v1101
    %v1283 = vsub.f32 %v946, %v1105
    %v1284 = vsub.f32 %v950, %v1105
    %v1285 = vsub.f32 %v946, %v1109
    %v1286 = vsub.f32 %v950, %v1109
    %v1287 = vsub.f32 %v946, %v1113
    %v1288 = vsub.f32 %v950, %v1113
    %v1289 = vsub.f32 %v946, %v1117
    %v1290 = vsub.f32 %v950, %v1117
    %v1291 = vsub.f32 %v946, %v1121
    %v1292 = vsub.f32 %v950, %v1121
    %v1293 = vsub.f32 %v946, %v1125
    %v1294 = vsub.f32 %v950, %v1125
    %v1295 = vsub.f32 %v946, %v1129
    %v1296 = vsub.f32 %v950, %v1129
    %v1297 = vsub.f32 %v946, %v1133
    %v1298 = vsub.f32 %v950, %v1133
    %v1299 = vsub.f32 %v946, %v1137
    %v1300 = vsub.f32 %v950, %v1137
    %v1301 = vsub.f32 %v946, %v1141
    %v1302 = vsub.f32 %v950, %v1141
    %v1303 = vsub.f32 %v946, %v1145
    %v1304 = vsub.f32 %v950, %v1145
    %v1305 = vsub.f32 %v946, %v1149
    %v1306 = vsub.f32 %v950, %v1149
    %v1307 = vsub.f32 %v946, %v1153
    %v1308 = vsub.f32 %v950, %v1153
    %v1309 = vsub.f32 %v946, %v1157
    %v1310 = vsub.f32 %v950, %v1157
    %v1311 = vsub.f32 %v946, %v1161
    %v1312 = vsub.f32 %v950, %v1161
    %v1313 = vsub.f32 %v946, %v1165
    %v1314 = vsub.f32 %v950, %v1165
    %v1315 = vsub.f32 %v946, %v1169
    %v1316 = vsub.f32 %v950, %v1169
    %v1317 = vsub.f32 %v946, %v1173
    %v1318 = vsub.f32 %v950, %v1173
    %v1319 = vsub.f32 %v946, %v1177
    %v1320 = vsub.f32 %v950, %v1177
    %v1321 = vsub.f32 %v946, %v1181
    %v1322 = vsub.f32 %v950, %v1181
    %v1323 = vsub.f32 %v946, %v1185
    %v1324 = vsub.f32 %v950, %v1185
    %v1325 = vsub.f32 %v946, %v1189
    %v1326 = vsub.f32 %v950, %v1189
    %v1327 = vsub.f32 %v946, %v1193
    %v1328 = vsub.f32 %v950, %v1193
    %v1329 = vsub.f32 %v946, %v1197
    %v1330 = vsub.f32 %v950, %v1197
    %v1331 = vsub.f32 %v946, %v1201
    %v1332 = vsub.f32 %v950, %v1201
    %v1333 = vsub.f32 %v946, %v1205
    %v1334 = vsub.f32 %v950, %v1205
    %v1335 = vand.u32 2147483647, %v1207
    %v1336 = vand.u32 2147483647, %v1208
    %v1337 = vand.u32 2147483647, %v1209
    %v1338 = vand.u32 2147483647, %v1210
    %v1339 = vand.u32 2147483647, %v1211
    %v1340 = vand.u32 2147483647, %v1212
    %v1341 = vand.u32 2147483647, %v1213
    %v1342 = vand.u32 2147483647, %v1214
    %v1343 = vand.u32 2147483647, %v1215
    %v1344 = vand.u32 2147483647, %v1216
    %v1345 = vand.u32 2147483647, %v1217
    %v1346 = vand.u32 2147483647, %v1218
    %v1347 = vand.u32 2147483647, %v1219
    %v1348 = vand.u32 2147483647, %v1220
    %v1349 = vand.u32 2147483647, %v1221
    %v1350 = vand.u32 2147483647, %v1222
    %v1351 = vand.u32 2147483647, %v1223
    %v1352 = vand.u32 2147483647, %v1224
    %v1353 = vand.u32 2147483647, %v1225
    %v1354 = vand.u32 2147483647, %v1226
    %v1355 = vand.u32 2147483647, %v1227
    %v1356 = vand.u32 2147483647, %v1228
    %v1357 = vand.u32 2147483647, %v1229
    %v1358 = vand.u32 2147483647, %v1230
    %v1359 = vand.u32 2147483647, %v1231
    %v1360 = vand.u32 2147483647, %v1232
    %v1361 = vand.u32 2147483647, %v1233
    %v1362 = vand.u32 2147483647, %v1234
    %v1363 = vand.u32 2147483647, %v1235
    %v1364 = vand.u32 2147483647, %v1236
    %v1365 = vand.u32 2147483647, %v1237
    %v1366 = vand.u32 2147483647, %v1238
    %v1367 = vand.u32 2147483647, %v1239
    %v1368 = vand.u32 2147483647, %v1240
    %v1369 = vand.u32 2147483647, %v1241
    %v1370 = vand.u32 2147483647, %v1242
    %v1371 = vand.u32 2147483647, %v1243
    %v1372 = vand.u32 2147483647, %v1244
    %v1373 = vand.u32 2147483647, %v1245
    %v1374 = vand.u32 2147483647, %v1246
    %v1375 = vand.u32 2147483647, %v1247
    %v1376 = vand.u32 2147483647, %v1248
    %v1377 = vand.u32 2147483647, %v1249
    %v1378 = vand.u32 2147483647, %v1250
    %v1379 = vand.u32 2147483647, %v1251
    %v1380 = vand.u32 2147483647, %v1252
    %v1381 = vand.u32 2147483647, %v1253
    %v1382 = vand.u32 2147483647, %v1254
    %v1383 = vand.u32 2147483647, %v1255
    %v1384 = vand.u32 2147483647, %v1256
    %v1385 = vand.u32 2147483647, %v1257
    %v1386 = vand.u32 2147483647, %v1258
    %v1387 = vand.u32 2147483647, %v1259
    %v1388 = vand.u32 2147483647, %v1260
    %v1389 = vand.u32 2147483647, %v1261
    %v1390 = vand.u32 2147483647, %v1262
    %v1391 = vand.u32 2147483647, %v1263
    %v1392 = vand.u32 2147483647, %v1264
    %v1393 = vand.u32 2147483647, %v1265
    %v1394 = vand.u32 2147483647, %v1266
    %v1395 = vand.u32 2147483647, %v1267
    %v1396 = vand.u32 2147483647, %v1268
    %v1397 = vand.u32 2147483647, %v1269
    %v1398 = vand.u32 2147483647, %v1270
    %v1399 = vand.u32 2147483647, %v1271
    %v1400 = vand.u32 2147483647, %v1272
    %v1401 = vand.u32 2147483647, %v1273
    %v1402 = vand.u32 2147483647, %v1274
    %v1403 = vand.u32 2147483647, %v1275
    %v1404 = vand.u32 2147483647, %v1276
    %v1405 = vand.u32 2147483647, %v1277
    %v1406 = vand.u32 2147483647, %v1278
    %v1407 = vand.u32 2147483647, %v1279
    %v1408 = vand.u32 2147483647, %v1280
    %v1409 = vand.u32 2147483647, %v1281
    %v1410 = vand.u32 2147483647, %v1282
    %v1411 = vand.u32 2147483647, %v1283
    %v1412 = vand.u32 2147483647, %v1284
    %v1413 = vand.u32 2147483647, %v1285
    %v1414 = vand.u32 2147483647, %v1286
    %v1415 = vand.u32 2147483647, %v1287
    %v1416 = vand.u32 2147483647, %v1288
    %v1417 = vand.u32 2147483647, %v1289
    %v1418 = vand.u32 2147483647, %v1290
    %v1419 = vand.u32 2147483647, %v1291
    %v1420 = vand.u32 2147483647, %v1292
    %v1421 = vand.u32 2147483647, %v1293
    %v1422 = vand.u32 2147483647, %v1294
    %v1423 = vand.u32 2147483647, %v1295
    %v1424 = vand.u32 2147483647, %v1296
    %v1425 = vand.u32 2147483647, %v1297
    %v1426 = vand.u32 2147483647, %v1298
    %v1427 = vand.u32 2147483647, %v1299
    %v1428 = vand.u32 2147483647, %v1300
    %v1429 = vand.u32 2147483647, %v1301
    %v1430 = vand.u32 2147483647, %v1302
    %v1431 = vand.u32 2147483647, %v1303
    %v1432 = vand.u32 2147483647, %v1304
    %v1433 = vand.u32 2147483647, %v1305
    %v1434 = vand.u32 2147483647, %v1306
    %v1435 = vand.u32 2147483647, %v1307
    %v1436 = vand.u32 2147483647, %v1308
    %v1437 = vand.u32 2147483647, %v1309
    %v1438 = vand.u32 2147483647, %v1310
    %v1439 = vand.u32 2147483647, %v1311
    %v1440 = vand.u32 2147483647, %v1312
    %v1441 = vand.u32 2147483647, %v1313
    %v1442 = vand.u32 2147483647, %v1314
    %v1443 = vand.u32 2147483647, %v1315
    %v1444 = vand.u32 2147483647, %v1316
    %v1445 = vand.u32 2147483647, %v1317
    %v1446 = vand.u32 2147483647, %v1318
    %v1447 = vand.u32 2147483647, %v1319
    %v1448 = vand.u32 2147483647, %v1320
    %v1449 = vand.u32 2147483647, %v1321
    %v1450 = vand.u32 2147483647, %v1322
    %v1451 = vand.u32 2147483647, %v1323
    %v1452 = vand.u32 2147483647, %v1324
    %v1453 = vand.u32 2147483647, %v1325
    %v1454 = vand.u32 2147483647, %v1326
    %v1455 = vand.u32 2147483647, %v1327
    %v1456 = vand.u32 2147483647, %v1328
    %v1457 = vand.u32 2147483647, %v1329
    %v1458 = vand.u32 2147483647, %v1330
    %v1459 = vand.u32 2147483647, %v1331
    %v1460 = vand.u32 2147483647, %v1332
    %v1461 = vand.u32 2147483647, %v1333
    %v1462 = vand.u32 2147483647, %v1334
    %v1463 = vsub.f32 1.0, %v1335
    %v1464 = vsub.f32 1.0, %v1336
    %v1465 = vsub.f32 1.0, %v1337
    %v1466 = vsub.f32 1.0, %v1338
    %v1467 = vsub.f32 1.0, %v1339
    %v1468 = vsub.f32 1.0, %v1340
    %v1469 = vsub.f32 1.0, %v1341
    %v1470 = vsub.f32 1.0, %v1342
    %v1471 = vsub.f32 1.0, %v1343
    %v1472 = vsub.f32 1.0, %v1344
    %v1473 = vsub.f32 1.0, %v1345
    %v1474 = vsub.f32 1.0, %v1346
    %v1475 = vsub.f32 1.0, %v1347
    %v1476 = vsub.f32 1.0, %v1348
    %v1477 = vsub.f32 1.0, %v1349
    %v1478 = vsub.f32 1.0, %v1350
    %v1479 = vsub.f32 1.0, %v1351
    %v1480 = vsub.f32 1.0, %v1352
    %v1481 = vsub.f32 1.0, %v1353
    %v1482 = vsub.f32 1.0, %v1354
    %v1483 = vsub.f32 1.0, %v1355
    %v1484 = vsub.f32 1.0, %v1356
    %v1485 = vsub.f32 1.0, %v1357
    %v1486 = vsub.f32 1.0, %v1358
    %v1487 = vsub.f32 1.0, %v1359
    %v1488 = vsub.f32 1.0, %v1360
    %v1489 = vsub.f32 1.0, %v1361
    %v1490 = vsub.f32 1.0, %v1362
    %v1491 = vsub.f32 1.0, %v1363
    %v1492 = vsub.f32 1.0, %v1364
    %v1493 = vsub.f32 1.0, %v1365
    %v1494 = vsub.f32 1.0, %v1366
    %v1495 = vsub.f32 1.0, %v1367
    %v1496 = vsub.f32 1.0, %v1368
    %v1497 = vsub.f32 1.0, %v1369
    %v1498 = vsub.f32 1.0, %v1370
    %v1499 = vsub.f32 1.0, %v1371
    %v1500 = vsub.f32 1.0, %v1372
    %v1501 = vsub.f32 1.0, %v1373
    %v1502 = vsub.f32 1.0, %v1374
    %v1503 = vsub.f32 1.0, %v1375
    %v1504 = vsub.f32 1.0, %v1376
    %v1505 = vsub.f32 1.0, %v1377
    %v1506 = vsub.f32 1.0, %v1378
    %v1507 = vsub.f32 1.0, %v1379
    %v1508 = vsub.f32 1.0, %v1380
    %v1509 = vsub.f32 1.0, %v1381
    %v1510 = vsub.f32 1.0, %v1382
    %v1511 = vsub.f32 1.0, %v1383
    %v1512 = vsub.f32 1.0, %v1384
    %v1513 = vsub.f32 1.0, %v1385
    %v1514 = vsub.f32 1.0, %v1386
    %v1515 = vsub.f32 1.0, %v1387
    %v1516 = vsub.f32 1.0, %v1388
    %v1517 = vsub.f32 1.0, %v1389
    %v1518 = vsub.f32 1.0, %v1390
    %v1519 = vsub.f32 1.0, %v1391
    %v1520 = vsub.f32 1.0, %v1392
    %v1521 = vsub.f32 1.0, %v1393
    %v1522 = vsub.f32 1.0, %v1394
    %v1523 = vsub.f32 1.0, %v1395
    %v1524 = vsub.f32 1.0, %v1396
    %v1525 = vsub.f32 1.0, %v1397
    %v1526 = vsub.f32 1.0, %v1398
    %v1527 = vsub.f32 1.0, %v1399
    %v1528 = vsub.f32 1.0, %v1400
    %v1529 = vsub.f32 1.0, %v1401
    %v1530 = vsub.f32 1.0, %v1402
    %v1531 = vsub.f32 1.0, %v1403
    %v1532 = vsub.f32 1.0, %v1404
    %v1533 = vsub.f32 1.0, %v1405
    %v1534 = vsub.f32 1.0, %v1406
    %v1535 = vsub.f32 1.0, %v1407
    %v1536 = vsub.f32 1.0, %v1408
    %v1537 = vsub.f32 1.0, %v1409
    %v1538 = vsub.f32 1.0, %v1410
    %v1539 = vsub.f32 1.0, %v1411
    %v1540 = vsub.f32 1.0, %v1412
    %v1541 = vsub.f32 1.0, %v1413
    %v1542 = vsub.f32 1.0, %v1414
    %v1543 = vsub.f32 1.0, %v1415
    %v1544 = vsub.f32 1.0, %v1416
    %v1545 = vsub.f32 1.0, %v1417
    %v1546 = vsub.f32 1.0, %v1418
    %v1547 = vsub.f32 1.0, %v1419
    %v1548 = vsub.f32 1.0, %v1420
    %v1549 = vsub.f32 1.0, %v1421
    %v1550 = vsub.f32 1.0, %v1422
    %v1551 = vsub.f32 1.0, %v1423
    %v1552 = vsub.f32 1.0, %v1424
    %v1553 = vsub.f32 1.0, %v1425
    %v1554 = vsub.f32 1.0, %v1426
    %v1555 = vsub.f32 1.0, %v1427
    %v1556 = vsub.f32 1.0, %v1428
    %v1557 = vsub.f32 1.0, %v1429
    %v1558 = vsub.f32 1.0, %v1430
    %v1559 = vsub.f32 1.0, %v1431
    %v1560 = vsub.f32 1.0, %v1432
    %v1561 = vsub.f32 1.0, %v1433
    %v1562 = vsub.f32 1.0, %v1434
    %v1563 = vsub.f32 1.0, %v1435
    %v1564 = vsub.f32 1.0, %v1436
    %v1565 = vsub.f32 1.0, %v1437
    %v1566 = vsub.f32 1.0, %v1438
    %v1567 = vsub.f32 1.0, %v1439
    %v1568 = vsub.f32 1.0, %v1440
    %v1569 = vsub.f32 1.0, %v1441
    %v1570 = vsub.f32 1.0, %v1442
    %v1571 = vsub.f32 1.0, %v1443
    %v1572 = vsub.f32 1.0, %v1444
    %v1573 = vsub.f32 1.0, %v1445
    %v1574 = vsub.f32 1.0, %v1446
    %v1575 = vsub.f32 1.0, %v1447
    %v1576 = vsub.f32 1.0, %v1448
    %v1577 = vsub.f32 1.0, %v1449
    %v1578 = vsub.f32 1.0, %v1450
    %v1579 = vsub.f32 1.0, %v1451
    %v1580 = vsub.f32 1.0, %v1452
    %v1581 = vsub.f32 1.0, %v1453
    %v1582 = vsub.f32 1.0, %v1454
    %v1583 = vsub.f32 1.0, %v1455
    %v1584 = vsub.f32 1.0, %v1456
    %v1585 = vsub.f32 1.0, %v1457
    %v1586 = vsub.f32 1.0, %v1458
    %v1587 = vsub.f32 1.0, %v1459
    %v1588 = vsub.f32 1.0, %v1460
    %v1589 = vsub.f32 1.0, %v1461
    %v1590 = vsub.f32 1.0, %v1462
    %v1591 = vmax.f32 %v1463, 0.0
    %v1592 = vmax.f32 %v1464, 0.0
    %v1593 = vmax.f32 %v1465, 0.0
    %v1594 = vmax.f32 %v1466, 0.0
    %v1595 = vmax.f32 %v1467, 0.0
    %v1596 = vmax.f32 %v1468, 0.0
    %v1597 = vmax.f32 %v1469, 0.0
    %v1598 = vmax.f32 %v1470, 0.0
    %v1599 = vmax.f32 %v1471, 0.0
    %v1600 = vmax.f32 %v1472, 0.0
    %v1601 = vmax.f32 %v1473, 0.0
    %v1602 = vmax.f32 %v1474, 0.0
    %v1603 = vmax.f32 %v1475, 0.0
    %v1604 = vmax.f32 %v1476, 0.0
    %v1605 = vmax.f32 %v1477, 0.0
    %v1606 = vmax.f32 %v1478, 0.0
    %v1607 = vmax.f32 %v1479, 0.0
    %v1608 = vmax.f32 %v1480, 0.0
    %v1609 = vmax.f32 %v1481, 0.0
    %v1610 = vmax.f32 %v1482, 0.0
    %v1611 = vmax.f32 %v1483, 0.0
    %v1612 = vmax.f32 %v1484, 0.0
    %v1613 = vmax.f32 %v1485, 0.0
    %v1614 = vmax.f32 %v1486, 0.0
    %v1615 = vmax.f32 %v1487, 0.0
    %v1616 = vmax.f32 %v1488, 0.0
    %v1617 = vmax.f32 %v1489, 0.0
    %v1618 = vmax.f32 %v1490, 0.0
    %v1619 = vmax.f32 %v1491, 0.0
    %v1620 = vmax.f32 %v1492, 0.0
    %v1621 = vmax.f32 %v1493, 0.0
    %v1622 = vmax.f32 %v1494, 0.0
    %v1623 = vmax.f32 %v1495, 0.0
    %v1624 = vmax.f32 %v1496, 0.0
    %v1625 = vmax.f32 %v1497, 0.0
    %v1626 = vmax.f32 %v1498, 0.0
    %v1627 = vmax.f32 %v1499, 0.0
    %v1628 = vmax.f32 %v1500, 0.0
    %v1629 = vmax.f32 %v1501, 0.0
    %v1630 = vmax.f32 %v1502, 0.0
    %v1631 = vmax.f32 %v1503, 0.0
    %v1632 = vmax.f32 %v1504, 0.0
    %v1633 = vmax.f32 %v1505, 0.0
    %v1634 = vmax.f32 %v1506, 0.0
    %v1635 = vmax.f32 %v1507, 0.0
    %v1636 = vmax.f32 %v1508, 0.0
    %v1637 = vmax.f32 %v1509, 0.0
    %v1638 = vmax.f32 %v1510, 0.0
    %v1639 = vmax.f32 %v1511, 0.0
    %v1640 = vmax.f32 %v1512, 0.0
    %v1641 = vmax.f32 %v1513, 0.0
    %v1642 = vmax.f32 %v1514, 0.0
    %v1643 = vmax.f32 %v1515, 0.0
    %v1644 = vmax.f32 %v1516, 0.0
    %v1645 = vmax.f32 %v1517, 0.0
    %v1646 = vmax.f32 %v1518, 0.0
    %v1647 = vmax.f32 %v1519, 0.0
    %v1648 = vmax.f32 %v1520, 0.0
    %v1649 = vmax.f32 %v1521, 0.0
    %v1650 = vmax.f32 %v1522, 0.0
    %v1651 = vmax.f32 %v1523, 0.0
    %v1652 = vmax.f32 %v1524, 0.0
    %v1653 = vmax.f32 %v1525, 0.0
    %v1654 = vmax.f32 %v1526, 0.0
    %v1655 = vmax.f32 %v1527, 0.0
    %v1656 = vmax.f32 %v1528, 0.0
    %v1657 = vmax.f32 %v1529, 0.0
    %v1658 = vmax.f32 %v1530, 0.0
    %v1659 = vmax.f32 %v1531, 0.0
    %v1660 = vmax.f32 %v1532, 0.0
    %v1661 = vmax.f32 %v1533, 0.0
    %v1662 = vmax.f32 %v1534, 0.0
    %v1663 = vmax.f32 %v1535, 0.0
    %v1664 = vmax.f32 %v1536, 0.0
    %v1665 = vmax.f32 %v1537, 0.0
    %v1666 = vmax.f32 %v1538, 0.0
    %v1667 = vmax.f32 %v1539, 0.0
    %v1668 = vmax.f32 %v1540, 0.0
    %v1669 = vmax.f32 %v1541, 0.0
    %v1670 = vmax.f32 %v1542, 0.0
    %v1671 = vmax.f32 %v1543, 0.0
    %v1672 = vmax.f32 %v1544, 0.0
    %v1673 = vmax.f32 %v1545, 0.0
    %v1674 = vmax.f32 %v1546, 0.0
    %v1675 = vmax.f32 %v1547, 0.0
    %v1676 = vmax.f32 %v1548, 0.0
    %v1677 = vmax.f32 %v1549, 0.0
    %v1678 = vmax.f32 %v1550, 0.0
    %v1679 = vmax.f32 %v1551, 0.0
    %v1680 = vmax.f32 %v1552, 0.0
    %v1681 = vmax.f32 %v1553, 0.0
    %v1682 = vmax.f32 %v1554, 0.0
    %v1683 = vmax.f32 %v1555, 0.0
    %v1684 = vmax.f32 %v1556, 0.0
    %v1685 = vmax.f32 %v1557, 0.0
    %v1686 = vmax.f32 %v1558, 0.0
    %v1687 = vmax.f32 %v1559, 0.0
    %v1688 = vmax.f32 %v1560, 0.0
    %v1689 = vmax.f32 %v1561, 0.0
    %v1690 = vmax.f32 %v1562, 0.0
    %v1691 = vmax.f32 %v1563, 0.0
    %v1692 = vmax.f32 %v1564, 0.0
    %v1693 = vmax.f32 %v1565, 0.0
    %v1694 = vmax.f32 %v1566, 0.0
    %v1695 = vmax.f32 %v1567, 0.0
    %v1696 = vmax.f32 %v1568, 0.0
    %v1697 = vmax.f32 %v1569, 0.0
    %v1698 = vmax.f32 %v1570, 0.0
    %v1699 = vmax.f32 %v1571, 0.0
    %v1700 = vmax.f32 %v1572, 0.0
    %v1701 = vmax.f32 %v1573, 0.0
    %v1702 = vmax.f32 %v1574, 0.0
    %v1703 = vmax.f32 %v1575, 0.0
    %v1704 = vmax.f32 %v1576, 0.0
    %v1705 = vmax.f32 %v1577, 0.0
    %v1706 = vmax.f32 %v1578, 0.0
    %v1707 = vmax.f32 %v1579, 0.0
    %v1708 = vmax.f32 %v1580, 0.0
    %v1709 = vmax.f32 %v1581, 0.0
    %v1710 = vmax.f32 %v1582, 0.0
    %v1711 = vmax.f32 %v1583, 0.0
    %v1712 = vmax.f32 %v1584, 0.0
    %v1713 = vmax.f32 %v1585, 0.0
    %v1714 = vmax.f32 %v1586, 0.0
    %v1715 = vmax.f32 %v1587, 0.0
    %v1716 = vmax.f32 %v1588, 0.0
    %v1717 = vmax.f32 %v1589, 0.0
    %v1718 = vmax.f32 %v1590, 0.0
    %v1719 = vlaneseq
    %v1720 = vshrl.u32 %v1719, 7
    %v1721 = vsub.s32 2, %v1720
    %v1722 = vrot.slane %v17, %v1721
    %v1723 = vlaneseq
    %v1724 = vshrl.u32 %v1723, 7
    %v1725 = vsub.s32 6, %v1724
    %v1726 = vrot.slane %v17, %v1725
    %v1729 = vlaneseq
    %v1730 = vshrl.u32 %v1729, 7
    %v1731 = vsub.s32 2, %v1730
    %v1732 = vrot.slane %v1722, %v1731
    %v1733 = vlaneseq
    %v1734 = vshrl.u32 %v1733, 7
    %v1735 = vsub.s32 2, %v1734
    %v1736 = vrot.slane %v1726, %v1735
    %1737 = vset.pattern.permute.xlu0 2
    %1738 = vperm.xlu0 %1737, %v18
    %v1739 = vpop.permute.xlu0 %1738
    %1741 = vset.pattern.permute.xlu0 2
    %1742 = vperm.xlu0 %1741, %v19
    %v1743 = vpop.permute.xlu0 %1742
    %1745 = vset.pattern.permute.xlu0 2
    %1746 = vperm.xlu0 %1745, %v20
    %v1747 = vpop.permute.xlu0 %1746
    %1749 = vset.pattern.permute.xlu0 2
    %1750 = vperm.xlu0 %1749, %v21
    %v1751 = vpop.permute.xlu0 %1750
    %1753 = vset.pattern.permute.xlu0 2
    %1754 = vperm.xlu0 %1753, %v22
    %v1755 = vpop.permute.xlu0 %1754
    %1757 = vset.pattern.permute.xlu0 2
    %1758 = vperm.xlu0 %1757, %v23
    %v1759 = vpop.permute.xlu0 %1758
    %1761 = vset.pattern.permute.xlu0 2
    %1762 = vperm.xlu0 %1761, %v24
    %v1763 = vpop.permute.xlu0 %1762
    %1765 = vset.pattern.permute.xlu0 2
    %1766 = vperm.xlu0 %1765, %v25
    %v1767 = vpop.permute.xlu0 %1766
    %1769 = vset.pattern.permute.xlu0 2
    %1770 = vperm.xlu0 %1769, %v26
    %v1771 = vpop.permute.xlu0 %1770
    %1773 = vset.pattern.permute.xlu0 2
    %1774 = vperm.xlu0 %1773, %v27
    %v1775 = vpop.permute.xlu0 %1774
    %1777 = vset.pattern.permute.xlu0 2
    %1778 = vperm.xlu0 %1777, %v28
    %v1779 = vpop.permute.xlu0 %1778
    %1781 = vset.pattern.permute.xlu0 2
    %1782 = vperm.xlu0 %1781, %v29
    %v1783 = vpop.permute.xlu0 %1782
    %1785 = vset.pattern.permute.xlu0 2
    %1786 = vperm.xlu0 %1785, %v30
    %v1787 = vpop.permute.xlu0 %1786
    %1789 = vset.pattern.permute.xlu0 2
    %1790 = vperm.xlu0 %1789, %v31
    %v1791 = vpop.permute.xlu0 %1790
    %1793 = vset.pattern.permute.xlu0 2
    %1794 = vperm.xlu0 %1793, %v32
    %v1795 = vpop.permute.xlu0 %1794
    %1797 = vset.pattern.permute.xlu0 2
    %1798 = vperm.xlu0 %1797, %v33
    %v1799 = vpop.permute.xlu0 %1798
    %1801 = vset.pattern.permute.xlu0 2
    %1802 = vperm.xlu0 %1801, %v34
    %v1803 = vpop.permute.xlu0 %1802
    %1805 = vset.pattern.permute.xlu0 2
    %1806 = vperm.xlu0 %1805, %v35
    %v1807 = vpop.permute.xlu0 %1806
    %1809 = vset.pattern.permute.xlu0 2
    %1810 = vperm.xlu0 %1809, %v36
    %v1811 = vpop.permute.xlu0 %1810
    %1813 = vset.pattern.permute.xlu0 2
    %1814 = vperm.xlu0 %1813, %v37
    %v1815 = vpop.permute.xlu0 %1814
    %1817 = vset.pattern.permute.xlu0 2
    %1818 = vperm.xlu0 %1817, %v38
    %v1819 = vpop.permute.xlu0 %1818
    %1821 = vset.pattern.permute.xlu0 2
    %1822 = vperm.xlu0 %1821, %v39
    %v1823 = vpop.permute.xlu0 %1822
    %1825 = vset.pattern.permute.xlu0 2
    %1826 = vperm.xlu0 %1825, %v40
    %v1827 = vpop.permute.xlu0 %1826
    %1829 = vset.pattern.permute.xlu0 2
    %1830 = vperm.xlu0 %1829, %v41
    %v1831 = vpop.permute.xlu0 %1830
    %1833 = vset.pattern.permute.xlu0 2
    %1834 = vperm.xlu0 %1833, %v42
    %v1835 = vpop.permute.xlu0 %1834
    %1837 = vset.pattern.permute.xlu0 2
    %1838 = vperm.xlu0 %1837, %v43
    %v1839 = vpop.permute.xlu0 %1838
    %1841 = vset.pattern.permute.xlu0 2
    %1842 = vperm.xlu0 %1841, %v44
    %v1843 = vpop.permute.xlu0 %1842
    %1845 = vset.pattern.permute.xlu0 2
    %1846 = vperm.xlu0 %1845, %v45
    %v1847 = vpop.permute.xlu0 %1846
    %1849 = vset.pattern.permute.xlu0 2
    %1850 = vperm.xlu0 %1849, %v46
    %v1851 = vpop.permute.xlu0 %1850
    %1853 = vset.pattern.permute.xlu0 2
    %1854 = vperm.xlu0 %1853, %v47
    %v1855 = vpop.permute.xlu0 %1854
    %1857 = vset.pattern.permute.xlu0 2
    %1858 = vperm.xlu0 %1857, %v48
    %v1859 = vpop.permute.xlu0 %1858
    %1861 = vset.pattern.permute.xlu0 2
    %1862 = vperm.xlu0 %1861, %v49
    %v1863 = vpop.permute.xlu0 %1862
    %1865 = vset.pattern.permute.xlu0 2
    %1866 = vperm.xlu0 %1865, %v50
    %v1867 = vpop.permute.xlu0 %1866
    %1869 = vset.pattern.permute.xlu0 2
    %1870 = vperm.xlu0 %1869, %v51
    %v1871 = vpop.permute.xlu0 %1870
    %1873 = vset.pattern.permute.xlu0 2
    %1874 = vperm.xlu0 %1873, %v52
    %v1875 = vpop.permute.xlu0 %1874
    %1877 = vset.pattern.permute.xlu0 2
    %1878 = vperm.xlu0 %1877, %v53
    %v1879 = vpop.permute.xlu0 %1878
    %1881 = vset.pattern.permute.xlu0 2
    %1882 = vperm.xlu0 %1881, %v54
    %v1883 = vpop.permute.xlu0 %1882
    %1885 = vset.pattern.permute.xlu0 2
    %1886 = vperm.xlu0 %1885, %v55
    %v1887 = vpop.permute.xlu0 %1886
    %1889 = vset.pattern.permute.xlu0 2
    %1890 = vperm.xlu0 %1889, %v56
    %v1891 = vpop.permute.xlu0 %1890
    %1893 = vset.pattern.permute.xlu0 2
    %1894 = vperm.xlu0 %1893, %v57
    %v1895 = vpop.permute.xlu0 %1894
    %1897 = vset.pattern.permute.xlu0 2
    %1898 = vperm.xlu0 %1897, %v58
    %v1899 = vpop.permute.xlu0 %1898
    %1901 = vset.pattern.permute.xlu0 2
    %1902 = vperm.xlu0 %1901, %v59
    %v1903 = vpop.permute.xlu0 %1902
    %1905 = vset.pattern.permute.xlu0 2
    %1906 = vperm.xlu0 %1905, %v60
    %v1907 = vpop.permute.xlu0 %1906
    %1909 = vset.pattern.permute.xlu0 2
    %1910 = vperm.xlu0 %1909, %v61
    %v1911 = vpop.permute.xlu0 %1910
    %1913 = vset.pattern.permute.xlu0 2
    %1914 = vperm.xlu0 %1913, %v62
    %v1915 = vpop.permute.xlu0 %1914
    %1917 = vset.pattern.permute.xlu0 2
    %1918 = vperm.xlu0 %1917, %v63
    %v1919 = vpop.permute.xlu0 %1918
    %1921 = vset.pattern.permute.xlu0 2
    %1922 = vperm.xlu0 %1921, %v64
    %v1923 = vpop.permute.xlu0 %1922
    %1925 = vset.pattern.permute.xlu0 2
    %1926 = vperm.xlu0 %1925, %v65
    %v1927 = vpop.permute.xlu0 %1926
    %1929 = vset.pattern.permute.xlu0 2
    %1930 = vperm.xlu0 %1929, %v66
    %v1931 = vpop.permute.xlu0 %1930
    %1933 = vset.pattern.permute.xlu0 2
    %1934 = vperm.xlu0 %1933, %v67
    %v1935 = vpop.permute.xlu0 %1934
    %1937 = vset.pattern.permute.xlu0 2
    %1938 = vperm.xlu0 %1937, %v68
    %v1939 = vpop.permute.xlu0 %1938
    %1941 = vset.pattern.permute.xlu0 2
    %1942 = vperm.xlu0 %1941, %v69
    %v1943 = vpop.permute.xlu0 %1942
    %1945 = vset.pattern.permute.xlu0 2
    %1946 = vperm.xlu0 %1945, %v70
    %v1947 = vpop.permute.xlu0 %1946
    %1949 = vset.pattern.permute.xlu0 2
    %1950 = vperm.xlu0 %1949, %v71
    %v1951 = vpop.permute.xlu0 %1950
    %1953 = vset.pattern.permute.xlu0 2
    %1954 = vperm.xlu0 %1953, %v72
    %v1955 = vpop.permute.xlu0 %1954
    %1957 = vset.pattern.permute.xlu0 2
    %1958 = vperm.xlu0 %1957, %v73
    %v1959 = vpop.permute.xlu0 %1958
    %1961 = vset.pattern.permute.xlu0 2
    %1962 = vperm.xlu0 %1961, %v74
    %v1963 = vpop.permute.xlu0 %1962
    %1965 = vset.pattern.permute.xlu0 2
    %1966 = vperm.xlu0 %1965, %v75
    %v1967 = vpop.permute.xlu0 %1966
    %1969 = vset.pattern.permute.xlu0 2
    %1970 = vperm.xlu0 %1969, %v76
    %v1971 = vpop.permute.xlu0 %1970
    %1973 = vset.pattern.permute.xlu0 2
    %1974 = vperm.xlu0 %1973, %v77
    %v1975 = vpop.permute.xlu0 %1974
    %1977 = vset.pattern.permute.xlu0 2
    %1978 = vperm.xlu0 %1977, %v78
    %v1979 = vpop.permute.xlu0 %1978
    %1981 = vset.pattern.permute.xlu0 2
    %1982 = vperm.xlu0 %1981, %v79
    %v1983 = vpop.permute.xlu0 %1982
    %1985 = vset.pattern.permute.xlu0 2
    %1986 = vperm.xlu0 %1985, %v80
    %v1987 = vpop.permute.xlu0 %1986
    %1989 = vset.pattern.permute.xlu0 2
    %1990 = vperm.xlu0 %1989, %v81
    %v1991 = vpop.permute.xlu0 %1990
    %v1993 = vsub.f32 %v1732, %v1739
    %v1994 = vsub.f32 %v1736, %v1739
    %v1995 = vsub.f32 %v1732, %v1743
    %v1996 = vsub.f32 %v1736, %v1743
    %v1997 = vsub.f32 %v1732, %v1747
    %v1998 = vsub.f32 %v1736, %v1747
    %v1999 = vsub.f32 %v1732, %v1751
    %v2000 = vsub.f32 %v1736, %v1751
    %v2001 = vsub.f32 %v1732, %v1755
    %v2002 = vsub.f32 %v1736, %v1755
    %v2003 = vsub.f32 %v1732, %v1759
    %v2004 = vsub.f32 %v1736, %v1759
    %v2005 = vsub.f32 %v1732, %v1763
    %v2006 = vsub.f32 %v1736, %v1763
    %v2007 = vsub.f32 %v1732, %v1767
    %v2008 = vsub.f32 %v1736, %v1767
    %v2009 = vsub.f32 %v1732, %v1771
    %v2010 = vsub.f32 %v1736, %v1771
    %v2011 = vsub.f32 %v1732, %v1775
    %v2012 = vsub.f32 %v1736, %v1775
    %v2013 = vsub.f32 %v1732, %v1779
    %v2014 = vsub.f32 %v1736, %v1779
    %v2015 = vsub.f32 %v1732, %v1783
    %v2016 = vsub.f32 %v1736, %v1783
    %v2017 = vsub.f32 %v1732, %v1787
    %v2018 = vsub.f32 %v1736, %v1787
    %v2019 = vsub.f32 %v1732, %v1791
    %v2020 = vsub.f32 %v1736, %v1791
    %v2021 = vsub.f32 %v1732, %v1795
    %v2022 = vsub.f32 %v1736, %v1795
    %v2023 = vsub.f32 %v1732, %v1799
    %v2024 = vsub.f32 %v1736, %v1799
    %v2025 = vsub.f32 %v1732, %v1803
    %v2026 = vsub.f32 %v1736, %v1803
    %v2027 = vsub.f32 %v1732, %v1807
    %v2028 = vsub.f32 %v1736, %v1807
    %v2029 = vsub.f32 %v1732, %v1811
    %v2030 = vsub.f32 %v1736, %v1811
    %v2031 = vsub.f32 %v1732, %v1815
    %v2032 = vsub.f32 %v1736, %v1815
    %v2033 = vsub.f32 %v1732, %v1819
    %v2034 = vsub.f32 %v1736, %v1819
    %v2035 = vsub.f32 %v1732, %v1823
    %v2036 = vsub.f32 %v1736, %v1823
    %v2037 = vsub.f32 %v1732, %v1827
    %v2038 = vsub.f32 %v1736, %v1827
    %v2039 = vsub.f32 %v1732, %v1831
    %v2040 = vsub.f32 %v1736, %v1831
    %v2041 = vsub.f32 %v1732, %v1835
    %v2042 = vsub.f32 %v1736, %v1835
    %v2043 = vsub.f32 %v1732, %v1839
    %v2044 = vsub.f32 %v1736, %v1839
    %v2045 = vsub.f32 %v1732, %v1843
    %v2046 = vsub.f32 %v1736, %v1843
    %v2047 = vsub.f32 %v1732, %v1847
    %v2048 = vsub.f32 %v1736, %v1847
    %v2049 = vsub.f32 %v1732, %v1851
    %v2050 = vsub.f32 %v1736, %v1851
    %v2051 = vsub.f32 %v1732, %v1855
    %v2052 = vsub.f32 %v1736, %v1855
    %v2053 = vsub.f32 %v1732, %v1859
    %v2054 = vsub.f32 %v1736, %v1859
    %v2055 = vsub.f32 %v1732, %v1863
    %v2056 = vsub.f32 %v1736, %v1863
    %v2057 = vsub.f32 %v1732, %v1867
    %v2058 = vsub.f32 %v1736, %v1867
    %v2059 = vsub.f32 %v1732, %v1871
    %v2060 = vsub.f32 %v1736, %v1871
    %v2061 = vsub.f32 %v1732, %v1875
    %v2062 = vsub.f32 %v1736, %v1875
    %v2063 = vsub.f32 %v1732, %v1879
    %v2064 = vsub.f32 %v1736, %v1879
    %v2065 = vsub.f32 %v1732, %v1883
    %v2066 = vsub.f32 %v1736, %v1883
    %v2067 = vsub.f32 %v1732, %v1887
    %v2068 = vsub.f32 %v1736, %v1887
    %v2069 = vsub.f32 %v1732, %v1891
    %v2070 = vsub.f32 %v1736, %v1891
    %v2071 = vsub.f32 %v1732, %v1895
    %v2072 = vsub.f32 %v1736, %v1895
    %v2073 = vsub.f32 %v1732, %v1899
    %v2074 = vsub.f32 %v1736, %v1899
    %v2075 = vsub.f32 %v1732, %v1903
    %v2076 = vsub.f32 %v1736, %v1903
    %v2077 = vsub.f32 %v1732, %v1907
    %v2078 = vsub.f32 %v1736, %v1907
    %v2079 = vsub.f32 %v1732, %v1911
    %v2080 = vsub.f32 %v1736, %v1911
    %v2081 = vsub.f32 %v1732, %v1915
    %v2082 = vsub.f32 %v1736, %v1915
    %v2083 = vsub.f32 %v1732, %v1919
    %v2084 = vsub.f32 %v1736, %v1919
    %v2085 = vsub.f32 %v1732, %v1923
    %v2086 = vsub.f32 %v1736, %v1923
    %v2087 = vsub.f32 %v1732, %v1927
    %v2088 = vsub.f32 %v1736, %v1927
    %v2089 = vsub.f32 %v1732, %v1931
    %v2090 = vsub.f32 %v1736, %v1931
    %v2091 = vsub.f32 %v1732, %v1935
    %v2092 = vsub.f32 %v1736, %v1935
    %v2093 = vsub.f32 %v1732, %v1939
    %v2094 = vsub.f32 %v1736, %v1939
    %v2095 = vsub.f32 %v1732, %v1943
    %v2096 = vsub.f32 %v1736, %v1943
    %v2097 = vsub.f32 %v1732, %v1947
    %v2098 = vsub.f32 %v1736, %v1947
    %v2099 = vsub.f32 %v1732, %v1951
    %v2100 = vsub.f32 %v1736, %v1951
    %v2101 = vsub.f32 %v1732, %v1955
    %v2102 = vsub.f32 %v1736, %v1955
    %v2103 = vsub.f32 %v1732, %v1959
    %v2104 = vsub.f32 %v1736, %v1959
    %v2105 = vsub.f32 %v1732, %v1963
    %v2106 = vsub.f32 %v1736, %v1963
    %v2107 = vsub.f32 %v1732, %v1967
    %v2108 = vsub.f32 %v1736, %v1967
    %v2109 = vsub.f32 %v1732, %v1971
    %v2110 = vsub.f32 %v1736, %v1971
    %v2111 = vsub.f32 %v1732, %v1975
    %v2112 = vsub.f32 %v1736, %v1975
    %v2113 = vsub.f32 %v1732, %v1979
    %v2114 = vsub.f32 %v1736, %v1979
    %v2115 = vsub.f32 %v1732, %v1983
    %v2116 = vsub.f32 %v1736, %v1983
    %v2117 = vsub.f32 %v1732, %v1987
    %v2118 = vsub.f32 %v1736, %v1987
    %v2119 = vsub.f32 %v1732, %v1991
    %v2120 = vsub.f32 %v1736, %v1991
    %v2121 = vand.u32 2147483647, %v1993
    %v2122 = vand.u32 2147483647, %v1994
    %v2123 = vand.u32 2147483647, %v1995
    %v2124 = vand.u32 2147483647, %v1996
    %v2125 = vand.u32 2147483647, %v1997
    %v2126 = vand.u32 2147483647, %v1998
    %v2127 = vand.u32 2147483647, %v1999
    %v2128 = vand.u32 2147483647, %v2000
    %v2129 = vand.u32 2147483647, %v2001
    %v2130 = vand.u32 2147483647, %v2002
    %v2131 = vand.u32 2147483647, %v2003
    %v2132 = vand.u32 2147483647, %v2004
    %v2133 = vand.u32 2147483647, %v2005
    %v2134 = vand.u32 2147483647, %v2006
    %v2135 = vand.u32 2147483647, %v2007
    %v2136 = vand.u32 2147483647, %v2008
    %v2137 = vand.u32 2147483647, %v2009
    %v2138 = vand.u32 2147483647, %v2010
    %v2139 = vand.u32 2147483647, %v2011
    %v2140 = vand.u32 2147483647, %v2012
    %v2141 = vand.u32 2147483647, %v2013
    %v2142 = vand.u32 2147483647, %v2014
    %v2143 = vand.u32 2147483647, %v2015
    %v2144 = vand.u32 2147483647, %v2016
    %v2145 = vand.u32 2147483647, %v2017
    %v2146 = vand.u32 2147483647, %v2018
    %v2147 = vand.u32 2147483647, %v2019
    %v2148 = vand.u32 2147483647, %v2020
    %v2149 = vand.u32 2147483647, %v2021
    %v2150 = vand.u32 2147483647, %v2022
    %v2151 = vand.u32 2147483647, %v2023
    %v2152 = vand.u32 2147483647, %v2024
    %v2153 = vand.u32 2147483647, %v2025
    %v2154 = vand.u32 2147483647, %v2026
    %v2155 = vand.u32 2147483647, %v2027
    %v2156 = vand.u32 2147483647, %v2028
    %v2157 = vand.u32 2147483647, %v2029
    %v2158 = vand.u32 2147483647, %v2030
    %v2159 = vand.u32 2147483647, %v2031
    %v2160 = vand.u32 2147483647, %v2032
    %v2161 = vand.u32 2147483647, %v2033
    %v2162 = vand.u32 2147483647, %v2034
    %v2163 = vand.u32 2147483647, %v2035
    %v2164 = vand.u32 2147483647, %v2036
    %v2165 = vand.u32 2147483647, %v2037
    %v2166 = vand.u32 2147483647, %v2038
    %v2167 = vand.u32 2147483647, %v2039
    %v2168 = vand.u32 2147483647, %v2040
    %v2169 = vand.u32 2147483647, %v2041
    %v2170 = vand.u32 2147483647, %v2042
    %v2171 = vand.u32 2147483647, %v2043
    %v2172 = vand.u32 2147483647, %v2044
    %v2173 = vand.u32 2147483647, %v2045
    %v2174 = vand.u32 2147483647, %v2046
    %v2175 = vand.u32 2147483647, %v2047
    %v2176 = vand.u32 2147483647, %v2048
    %v2177 = vand.u32 2147483647, %v2049
    %v2178 = vand.u32 2147483647, %v2050
    %v2179 = vand.u32 2147483647, %v2051
    %v2180 = vand.u32 2147483647, %v2052
    %v2181 = vand.u32 2147483647, %v2053
    %v2182 = vand.u32 2147483647, %v2054
    %v2183 = vand.u32 2147483647, %v2055
    %v2184 = vand.u32 2147483647, %v2056
    %v2185 = vand.u32 2147483647, %v2057
    %v2186 = vand.u32 2147483647, %v2058
    %v2187 = vand.u32 2147483647, %v2059
    %v2188 = vand.u32 2147483647, %v2060
    %v2189 = vand.u32 2147483647, %v2061
    %v2190 = vand.u32 2147483647, %v2062
    %v2191 = vand.u32 2147483647, %v2063
    %v2192 = vand.u32 2147483647, %v2064
    %v2193 = vand.u32 2147483647, %v2065
    %v2194 = vand.u32 2147483647, %v2066
    %v2195 = vand.u32 2147483647, %v2067
    %v2196 = vand.u32 2147483647, %v2068
    %v2197 = vand.u32 2147483647, %v2069
    %v2198 = vand.u32 2147483647, %v2070
    %v2199 = vand.u32 2147483647, %v2071
    %v2200 = vand.u32 2147483647, %v2072
    %v2201 = vand.u32 2147483647, %v2073
    %v2202 = vand.u32 2147483647, %v2074
    %v2203 = vand.u32 2147483647, %v2075
    %v2204 = vand.u32 2147483647, %v2076
    %v2205 = vand.u32 2147483647, %v2077
    %v2206 = vand.u32 2147483647, %v2078
    %v2207 = vand.u32 2147483647, %v2079
    %v2208 = vand.u32 2147483647, %v2080
    %v2209 = vand.u32 2147483647, %v2081
    %v2210 = vand.u32 2147483647, %v2082
    %v2211 = vand.u32 2147483647, %v2083
    %v2212 = vand.u32 2147483647, %v2084
    %v2213 = vand.u32 2147483647, %v2085
    %v2214 = vand.u32 2147483647, %v2086
    %v2215 = vand.u32 2147483647, %v2087
    %v2216 = vand.u32 2147483647, %v2088
    %v2217 = vand.u32 2147483647, %v2089
    %v2218 = vand.u32 2147483647, %v2090
    %v2219 = vand.u32 2147483647, %v2091
    %v2220 = vand.u32 2147483647, %v2092
    %v2221 = vand.u32 2147483647, %v2093
    %v2222 = vand.u32 2147483647, %v2094
    %v2223 = vand.u32 2147483647, %v2095
    %v2224 = vand.u32 2147483647, %v2096
    %v2225 = vand.u32 2147483647, %v2097
    %v2226 = vand.u32 2147483647, %v2098
    %v2227 = vand.u32 2147483647, %v2099
    %v2228 = vand.u32 2147483647, %v2100
    %v2229 = vand.u32 2147483647, %v2101
    %v2230 = vand.u32 2147483647, %v2102
    %v2231 = vand.u32 2147483647, %v2103
    %v2232 = vand.u32 2147483647, %v2104
    %v2233 = vand.u32 2147483647, %v2105
    %v2234 = vand.u32 2147483647, %v2106
    %v2235 = vand.u32 2147483647, %v2107
    %v2236 = vand.u32 2147483647, %v2108
    %v2237 = vand.u32 2147483647, %v2109
    %v2238 = vand.u32 2147483647, %v2110
    %v2239 = vand.u32 2147483647, %v2111
    %v2240 = vand.u32 2147483647, %v2112
    %v2241 = vand.u32 2147483647, %v2113
    %v2242 = vand.u32 2147483647, %v2114
    %v2243 = vand.u32 2147483647, %v2115
    %v2244 = vand.u32 2147483647, %v2116
    %v2245 = vand.u32 2147483647, %v2117
    %v2246 = vand.u32 2147483647, %v2118
    %v2247 = vand.u32 2147483647, %v2119
    %v2248 = vand.u32 2147483647, %v2120
    %v2249 = vsub.f32 1.0, %v2121
    %v2250 = vsub.f32 1.0, %v2122
    %v2251 = vsub.f32 1.0, %v2123
    %v2252 = vsub.f32 1.0, %v2124
    %v2253 = vsub.f32 1.0, %v2125
    %v2254 = vsub.f32 1.0, %v2126
    %v2255 = vsub.f32 1.0, %v2127
    %v2256 = vsub.f32 1.0, %v2128
    %v2257 = vsub.f32 1.0, %v2129
    %v2258 = vsub.f32 1.0, %v2130
    %v2259 = vsub.f32 1.0, %v2131
    %v2260 = vsub.f32 1.0, %v2132
    %v2261 = vsub.f32 1.0, %v2133
    %v2262 = vsub.f32 1.0, %v2134
    %v2263 = vsub.f32 1.0, %v2135
    %v2264 = vsub.f32 1.0, %v2136
    %v2265 = vsub.f32 1.0, %v2137
    %v2266 = vsub.f32 1.0, %v2138
    %v2267 = vsub.f32 1.0, %v2139
    %v2268 = vsub.f32 1.0, %v2140
    %v2269 = vsub.f32 1.0, %v2141
    %v2270 = vsub.f32 1.0, %v2142
    %v2271 = vsub.f32 1.0, %v2143
    %v2272 = vsub.f32 1.0, %v2144
    %v2273 = vsub.f32 1.0, %v2145
    %v2274 = vsub.f32 1.0, %v2146
    %v2275 = vsub.f32 1.0, %v2147
    %v2276 = vsub.f32 1.0, %v2148
    %v2277 = vsub.f32 1.0, %v2149
    %v2278 = vsub.f32 1.0, %v2150
    %v2279 = vsub.f32 1.0, %v2151
    %v2280 = vsub.f32 1.0, %v2152
    %v2281 = vsub.f32 1.0, %v2153
    %v2282 = vsub.f32 1.0, %v2154
    %v2283 = vsub.f32 1.0, %v2155
    %v2284 = vsub.f32 1.0, %v2156
    %v2285 = vsub.f32 1.0, %v2157
    %v2286 = vsub.f32 1.0, %v2158
    %v2287 = vsub.f32 1.0, %v2159
    %v2288 = vsub.f32 1.0, %v2160
    %v2289 = vsub.f32 1.0, %v2161
    %v2290 = vsub.f32 1.0, %v2162
    %v2291 = vsub.f32 1.0, %v2163
    %v2292 = vsub.f32 1.0, %v2164
    %v2293 = vsub.f32 1.0, %v2165
    %v2294 = vsub.f32 1.0, %v2166
    %v2295 = vsub.f32 1.0, %v2167
    %v2296 = vsub.f32 1.0, %v2168
    %v2297 = vsub.f32 1.0, %v2169
    %v2298 = vsub.f32 1.0, %v2170
    %v2299 = vsub.f32 1.0, %v2171
    %v2300 = vsub.f32 1.0, %v2172
    %v2301 = vsub.f32 1.0, %v2173
    %v2302 = vsub.f32 1.0, %v2174
    %v2303 = vsub.f32 1.0, %v2175
    %v2304 = vsub.f32 1.0, %v2176
    %v2305 = vsub.f32 1.0, %v2177
    %v2306 = vsub.f32 1.0, %v2178
    %v2307 = vsub.f32 1.0, %v2179
    %v2308 = vsub.f32 1.0, %v2180
    %v2309 = vsub.f32 1.0, %v2181
    %v2310 = vsub.f32 1.0, %v2182
    %v2311 = vsub.f32 1.0, %v2183
    %v2312 = vsub.f32 1.0, %v2184
    %v2313 = vsub.f32 1.0, %v2185
    %v2314 = vsub.f32 1.0, %v2186
    %v2315 = vsub.f32 1.0, %v2187
    %v2316 = vsub.f32 1.0, %v2188
    %v2317 = vsub.f32 1.0, %v2189
    %v2318 = vsub.f32 1.0, %v2190
    %v2319 = vsub.f32 1.0, %v2191
    %v2320 = vsub.f32 1.0, %v2192
    %v2321 = vsub.f32 1.0, %v2193
    %v2322 = vsub.f32 1.0, %v2194
    %v2323 = vsub.f32 1.0, %v2195
    %v2324 = vsub.f32 1.0, %v2196
    %v2325 = vsub.f32 1.0, %v2197
    %v2326 = vsub.f32 1.0, %v2198
    %v2327 = vsub.f32 1.0, %v2199
    %v2328 = vsub.f32 1.0, %v2200
    %v2329 = vsub.f32 1.0, %v2201
    %v2330 = vsub.f32 1.0, %v2202
    %v2331 = vsub.f32 1.0, %v2203
    %v2332 = vsub.f32 1.0, %v2204
    %v2333 = vsub.f32 1.0, %v2205
    %v2334 = vsub.f32 1.0, %v2206
    %v2335 = vsub.f32 1.0, %v2207
    %v2336 = vsub.f32 1.0, %v2208
    %v2337 = vsub.f32 1.0, %v2209
    %v2338 = vsub.f32 1.0, %v2210
    %v2339 = vsub.f32 1.0, %v2211
    %v2340 = vsub.f32 1.0, %v2212
    %v2341 = vsub.f32 1.0, %v2213
    %v2342 = vsub.f32 1.0, %v2214
    %v2343 = vsub.f32 1.0, %v2215
    %v2344 = vsub.f32 1.0, %v2216
    %v2345 = vsub.f32 1.0, %v2217
    %v2346 = vsub.f32 1.0, %v2218
    %v2347 = vsub.f32 1.0, %v2219
    %v2348 = vsub.f32 1.0, %v2220
    %v2349 = vsub.f32 1.0, %v2221
    %v2350 = vsub.f32 1.0, %v2222
    %v2351 = vsub.f32 1.0, %v2223
    %v2352 = vsub.f32 1.0, %v2224
    %v2353 = vsub.f32 1.0, %v2225
    %v2354 = vsub.f32 1.0, %v2226
    %v2355 = vsub.f32 1.0, %v2227
    %v2356 = vsub.f32 1.0, %v2228
    %v2357 = vsub.f32 1.0, %v2229
    %v2358 = vsub.f32 1.0, %v2230
    %v2359 = vsub.f32 1.0, %v2231
    %v2360 = vsub.f32 1.0, %v2232
    %v2361 = vsub.f32 1.0, %v2233
    %v2362 = vsub.f32 1.0, %v2234
    %v2363 = vsub.f32 1.0, %v2235
    %v2364 = vsub.f32 1.0, %v2236
    %v2365 = vsub.f32 1.0, %v2237
    %v2366 = vsub.f32 1.0, %v2238
    %v2367 = vsub.f32 1.0, %v2239
    %v2368 = vsub.f32 1.0, %v2240
    %v2369 = vsub.f32 1.0, %v2241
    %v2370 = vsub.f32 1.0, %v2242
    %v2371 = vsub.f32 1.0, %v2243
    %v2372 = vsub.f32 1.0, %v2244
    %v2373 = vsub.f32 1.0, %v2245
    %v2374 = vsub.f32 1.0, %v2246
    %v2375 = vsub.f32 1.0, %v2247
    %v2376 = vsub.f32 1.0, %v2248
    %v2377 = vmax.f32 %v2249, 0.0
    %v2378 = vmax.f32 %v2250, 0.0
    %v2379 = vmax.f32 %v2251, 0.0
    %v2380 = vmax.f32 %v2252, 0.0
    %v2381 = vmax.f32 %v2253, 0.0
    %v2382 = vmax.f32 %v2254, 0.0
    %v2383 = vmax.f32 %v2255, 0.0
    %v2384 = vmax.f32 %v2256, 0.0
    %v2385 = vmax.f32 %v2257, 0.0
    %v2386 = vmax.f32 %v2258, 0.0
    %v2387 = vmax.f32 %v2259, 0.0
    %v2388 = vmax.f32 %v2260, 0.0
    %v2389 = vmax.f32 %v2261, 0.0
    %v2390 = vmax.f32 %v2262, 0.0
    %v2391 = vmax.f32 %v2263, 0.0
    %v2392 = vmax.f32 %v2264, 0.0
    %v2393 = vmax.f32 %v2265, 0.0
    %v2394 = vmax.f32 %v2266, 0.0
    %v2395 = vmax.f32 %v2267, 0.0
    %v2396 = vmax.f32 %v2268, 0.0
    %v2397 = vmax.f32 %v2269, 0.0
    %v2398 = vmax.f32 %v2270, 0.0
    %v2399 = vmax.f32 %v2271, 0.0
    %v2400 = vmax.f32 %v2272, 0.0
    %v2401 = vmax.f32 %v2273, 0.0
    %v2402 = vmax.f32 %v2274, 0.0
    %v2403 = vmax.f32 %v2275, 0.0
    %v2404 = vmax.f32 %v2276, 0.0
    %v2405 = vmax.f32 %v2277, 0.0
    %v2406 = vmax.f32 %v2278, 0.0
    %v2407 = vmax.f32 %v2279, 0.0
    %v2408 = vmax.f32 %v2280, 0.0
    %v2409 = vmax.f32 %v2281, 0.0
    %v2410 = vmax.f32 %v2282, 0.0
    %v2411 = vmax.f32 %v2283, 0.0
    %v2412 = vmax.f32 %v2284, 0.0
    %v2413 = vmax.f32 %v2285, 0.0
    %v2414 = vmax.f32 %v2286, 0.0
    %v2415 = vmax.f32 %v2287, 0.0
    %v2416 = vmax.f32 %v2288, 0.0
    %v2417 = vmax.f32 %v2289, 0.0
    %v2418 = vmax.f32 %v2290, 0.0
    %v2419 = vmax.f32 %v2291, 0.0
    %v2420 = vmax.f32 %v2292, 0.0
    %v2421 = vmax.f32 %v2293, 0.0
    %v2422 = vmax.f32 %v2294, 0.0
    %v2423 = vmax.f32 %v2295, 0.0
    %v2424 = vmax.f32 %v2296, 0.0
    %v2425 = vmax.f32 %v2297, 0.0
    %v2426 = vmax.f32 %v2298, 0.0
    %v2427 = vmax.f32 %v2299, 0.0
    %v2428 = vmax.f32 %v2300, 0.0
    %v2429 = vmax.f32 %v2301, 0.0
    %v2430 = vmax.f32 %v2302, 0.0
    %v2431 = vmax.f32 %v2303, 0.0
    %v2432 = vmax.f32 %v2304, 0.0
    %v2433 = vmax.f32 %v2305, 0.0
    %v2434 = vmax.f32 %v2306, 0.0
    %v2435 = vmax.f32 %v2307, 0.0
    %v2436 = vmax.f32 %v2308, 0.0
    %v2437 = vmax.f32 %v2309, 0.0
    %v2438 = vmax.f32 %v2310, 0.0
    %v2439 = vmax.f32 %v2311, 0.0
    %v2440 = vmax.f32 %v2312, 0.0
    %v2441 = vmax.f32 %v2313, 0.0
    %v2442 = vmax.f32 %v2314, 0.0
    %v2443 = vmax.f32 %v2315, 0.0
    %v2444 = vmax.f32 %v2316, 0.0
    %v2445 = vmax.f32 %v2317, 0.0
    %v2446 = vmax.f32 %v2318, 0.0
    %v2447 = vmax.f32 %v2319, 0.0
    %v2448 = vmax.f32 %v2320, 0.0
    %v2449 = vmax.f32 %v2321, 0.0
    %v2450 = vmax.f32 %v2322, 0.0
    %v2451 = vmax.f32 %v2323, 0.0
    %v2452 = vmax.f32 %v2324, 0.0
    %v2453 = vmax.f32 %v2325, 0.0
    %v2454 = vmax.f32 %v2326, 0.0
    %v2455 = vmax.f32 %v2327, 0.0
    %v2456 = vmax.f32 %v2328, 0.0
    %v2457 = vmax.f32 %v2329, 0.0
    %v2458 = vmax.f32 %v2330, 0.0
    %v2459 = vmax.f32 %v2331, 0.0
    %v2460 = vmax.f32 %v2332, 0.0
    %v2461 = vmax.f32 %v2333, 0.0
    %v2462 = vmax.f32 %v2334, 0.0
    %v2463 = vmax.f32 %v2335, 0.0
    %v2464 = vmax.f32 %v2336, 0.0
    %v2465 = vmax.f32 %v2337, 0.0
    %v2466 = vmax.f32 %v2338, 0.0
    %v2467 = vmax.f32 %v2339, 0.0
    %v2468 = vmax.f32 %v2340, 0.0
    %v2469 = vmax.f32 %v2341, 0.0
    %v2470 = vmax.f32 %v2342, 0.0
    %v2471 = vmax.f32 %v2343, 0.0
    %v2472 = vmax.f32 %v2344, 0.0
    %v2473 = vmax.f32 %v2345, 0.0
    %v2474 = vmax.f32 %v2346, 0.0
    %v2475 = vmax.f32 %v2347, 0.0
    %v2476 = vmax.f32 %v2348, 0.0
    %v2477 = vmax.f32 %v2349, 0.0
    %v2478 = vmax.f32 %v2350, 0.0
    %v2479 = vmax.f32 %v2351, 0.0
    %v2480 = vmax.f32 %v2352, 0.0
    %v2481 = vmax.f32 %v2353, 0.0
    %v2482 = vmax.f32 %v2354, 0.0
    %v2483 = vmax.f32 %v2355, 0.0
    %v2484 = vmax.f32 %v2356, 0.0
    %v2485 = vmax.f32 %v2357, 0.0
    %v2486 = vmax.f32 %v2358, 0.0
    %v2487 = vmax.f32 %v2359, 0.0
    %v2488 = vmax.f32 %v2360, 0.0
    %v2489 = vmax.f32 %v2361, 0.0
    %v2490 = vmax.f32 %v2362, 0.0
    %v2491 = vmax.f32 %v2363, 0.0
    %v2492 = vmax.f32 %v2364, 0.0
    %v2493 = vmax.f32 %v2365, 0.0
    %v2494 = vmax.f32 %v2366, 0.0
    %v2495 = vmax.f32 %v2367, 0.0
    %v2496 = vmax.f32 %v2368, 0.0
    %v2497 = vmax.f32 %v2369, 0.0
    %v2498 = vmax.f32 %v2370, 0.0
    %v2499 = vmax.f32 %v2371, 0.0
    %v2500 = vmax.f32 %v2372, 0.0
    %v2501 = vmax.f32 %v2373, 0.0
    %v2502 = vmax.f32 %v2374, 0.0
    %v2503 = vmax.f32 %v2375, 0.0
    %v2504 = vmax.f32 %v2376, 0.0
    %v2505 = vmul.f32 %v805, %v1591
    %v2506 = vmul.f32 %v806, %v1592
    %v2507 = vmul.f32 %v807, %v1593
    %v2508 = vmul.f32 %v808, %v1594
    %v2509 = vmul.f32 %v809, %v1595
    %v2510 = vmul.f32 %v810, %v1596
    %v2511 = vmul.f32 %v811, %v1597
    %v2512 = vmul.f32 %v812, %v1598
    %v2513 = vmul.f32 %v813, %v1599
    %v2514 = vmul.f32 %v814, %v1600
    %v2515 = vmul.f32 %v815, %v1601
    %v2516 = vmul.f32 %v816, %v1602
    %v2517 = vmul.f32 %v817, %v1603
    %v2518 = vmul.f32 %v818, %v1604
    %v2519 = vmul.f32 %v819, %v1605
    %v2520 = vmul.f32 %v820, %v1606
    %v2521 = vmul.f32 %v821, %v1607
    %v2522 = vmul.f32 %v822, %v1608
    %v2523 = vmul.f32 %v823, %v1609
    %v2524 = vmul.f32 %v824, %v1610
    %v2525 = vmul.f32 %v825, %v1611
    %v2526 = vmul.f32 %v826, %v1612
    %v2527 = vmul.f32 %v827, %v1613
    %v2528 = vmul.f32 %v828, %v1614
    %v2529 = vmul.f32 %v829, %v1615
    %v2530 = vmul.f32 %v830, %v1616
    %v2531 = vmul.f32 %v831, %v1617
    %v2532 = vmul.f32 %v832, %v1618
    %v2533 = vmul.f32 %v833, %v1619
    %v2534 = vmul.f32 %v834, %v1620
    %v2535 = vmul.f32 %v835, %v1621
    %v2536 = vmul.f32 %v836, %v1622
    %v2537 = vmul.f32 %v837, %v1623
    %v2538 = vmul.f32 %v838, %v1624
    %v2539 = vmul.f32 %v839, %v1625
    %v2540 = vmul.f32 %v840, %v1626
    %v2541 = vmul.f32 %v841, %v1627
    %v2542 = vmul.f32 %v842, %v1628
    %v2543 = vmul.f32 %v843, %v1629
    %v2544 = vmul.f32 %v844, %v1630
    %v2545 = vmul.f32 %v845, %v1631
    %v2546 = vmul.f32 %v846, %v1632
    %v2547 = vmul.f32 %v847, %v1633
    %v2548 = vmul.f32 %v848, %v1634
    %v2549 = vmul.f32 %v849, %v1635
    %v2550 = vmul.f32 %v850, %v1636
    %v2551 = vmul.f32 %v851, %v1637
    %v2552 = vmul.f32 %v852, %v1638
    %v2553 = vmul.f32 %v853, %v1639
    %v2554 = vmul.f32 %v854, %v1640
    %v2555 = vmul.f32 %v855, %v1641
    %v2556 = vmul.f32 %v856, %v1642
    %v2557 = vmul.f32 %v857, %v1643
    %v2558 = vmul.f32 %v858, %v1644
    %v2559 = vmul.f32 %v859, %v1645
    %v2560 = vmul.f32 %v860, %v1646
    %v2561 = vmul.f32 %v861, %v1647
    %v2562 = vmul.f32 %v862, %v1648
    %v2563 = vmul.f32 %v863, %v1649
    %v2564 = vmul.f32 %v864, %v1650
    %v2565 = vmul.f32 %v865, %v1651
    %v2566 = vmul.f32 %v866, %v1652
    %v2567 = vmul.f32 %v867, %v1653
    %v2568 = vmul.f32 %v868, %v1654
    %v2569 = vmul.f32 %v869, %v1655
    %v2570 = vmul.f32 %v870, %v1656
    %v2571 = vmul.f32 %v871, %v1657
    %v2572 = vmul.f32 %v872, %v1658
    %v2573 = vmul.f32 %v873, %v1659
    %v2574 = vmul.f32 %v874, %v1660
    %v2575 = vmul.f32 %v875, %v1661
    %v2576 = vmul.f32 %v876, %v1662
    %v2577 = vmul.f32 %v877, %v1663
    %v2578 = vmul.f32 %v878, %v1664
    %v2579 = vmul.f32 %v879, %v1665
    %v2580 = vmul.f32 %v880, %v1666
    %v2581 = vmul.f32 %v881, %v1667
    %v2582 = vmul.f32 %v882, %v1668
    %v2583 = vmul.f32 %v883, %v1669
    %v2584 = vmul.f32 %v884, %v1670
    %v2585 = vmul.f32 %v885, %v1671
    %v2586 = vmul.f32 %v886, %v1672
    %v2587 = vmul.f32 %v887, %v1673
    %v2588 = vmul.f32 %v888, %v1674
    %v2589 = vmul.f32 %v889, %v1675
    %v2590 = vmul.f32 %v890, %v1676
    %v2591 = vmul.f32 %v891, %v1677
    %v2592 = vmul.f32 %v892, %v1678
    %v2593 = vmul.f32 %v893, %v1679
    %v2594 = vmul.f32 %v894, %v1680
    %v2595 = vmul.f32 %v895, %v1681
    %v2596 = vmul.f32 %v896, %v1682
    %v2597 = vmul.f32 %v897, %v1683
    %v2598 = vmul.f32 %v898, %v1684
    %v2599 = vmul.f32 %v899, %v1685
    %v2600 = vmul.f32 %v900, %v1686
    %v2601 = vmul.f32 %v901, %v1687
    %v2602 = vmul.f32 %v902, %v1688
    %v2603 = vmul.f32 %v903, %v1689
    %v2604 = vmul.f32 %v904, %v1690
    %v2605 = vmul.f32 %v905, %v1691
    %v2606 = vmul.f32 %v906, %v1692
    %v2607 = vmul.f32 %v907, %v1693
    %v2608 = vmul.f32 %v908, %v1694
    %v2609 = vmul.f32 %v909, %v1695
    %v2610 = vmul.f32 %v910, %v1696
    %v2611 = vmul.f32 %v911, %v1697
    %v2612 = vmul.f32 %v912, %v1698
    %v2613 = vmul.f32 %v913, %v1699
    %v2614 = vmul.f32 %v914, %v1700
    %v2615 = vmul.f32 %v915, %v1701
    %v2616 = vmul.f32 %v916, %v1702
    %v2617 = vmul.f32 %v917, %v1703
    %v2618 = vmul.f32 %v918, %v1704
    %v2619 = vmul.f32 %v919, %v1705
    %v2620 = vmul.f32 %v920, %v1706
    %v2621 = vmul.f32 %v921, %v1707
    %v2622 = vmul.f32 %v922, %v1708
    %v2623 = vmul.f32 %v923, %v1709
    %v2624 = vmul.f32 %v924, %v1710
    %v2625 = vmul.f32 %v925, %v1711
    %v2626 = vmul.f32 %v926, %v1712
    %v2627 = vmul.f32 %v927, %v1713
    %v2628 = vmul.f32 %v928, %v1714
    %v2629 = vmul.f32 %v929, %v1715
    %v2630 = vmul.f32 %v930, %v1716
    %v2631 = vmul.f32 %v931, %v1717
    %v2632 = vmul.f32 %v932, %v1718
    %v2633 = vmul.f32 %v2505, %v2377
    %v2634 = vmul.f32 %v2506, %v2378
    %v2635 = vmul.f32 %v2507, %v2379
    %v2636 = vmul.f32 %v2508, %v2380
    %v2637 = vmul.f32 %v2509, %v2381
    %v2638 = vmul.f32 %v2510, %v2382
    %v2639 = vmul.f32 %v2511, %v2383
    %v2640 = vmul.f32 %v2512, %v2384
    %v2641 = vmul.f32 %v2513, %v2385
    %v2642 = vmul.f32 %v2514, %v2386
    %v2643 = vmul.f32 %v2515, %v2387
    %v2644 = vmul.f32 %v2516, %v2388
    %v2645 = vmul.f32 %v2517, %v2389
    %v2646 = vmul.f32 %v2518, %v2390
    %v2647 = vmul.f32 %v2519, %v2391
    %v2648 = vmul.f32 %v2520, %v2392
    %v2649 = vmul.f32 %v2521, %v2393
    %v2650 = vmul.f32 %v2522, %v2394
    %v2651 = vmul.f32 %v2523, %v2395
    %v2652 = vmul.f32 %v2524, %v2396
    %v2653 = vmul.f32 %v2525, %v2397
    %v2654 = vmul.f32 %v2526, %v2398
    %v2655 = vmul.f32 %v2527, %v2399
    %v2656 = vmul.f32 %v2528, %v2400
    %v2657 = vmul.f32 %v2529, %v2401
    %v2658 = vmul.f32 %v2530, %v2402
    %v2659 = vmul.f32 %v2531, %v2403
    %v2660 = vmul.f32 %v2532, %v2404
    %v2661 = vmul.f32 %v2533, %v2405
    %v2662 = vmul.f32 %v2534, %v2406
    %v2663 = vmul.f32 %v2535, %v2407
    %v2664 = vmul.f32 %v2536, %v2408
    %v2665 = vmul.f32 %v2537, %v2409
    %v2666 = vmul.f32 %v2538, %v2410
    %v2667 = vmul.f32 %v2539, %v2411
    %v2668 = vmul.f32 %v2540, %v2412
    %v2669 = vmul.f32 %v2541, %v2413
    %v2670 = vmul.f32 %v2542, %v2414
    %v2671 = vmul.f32 %v2543, %v2415
    %v2672 = vmul.f32 %v2544, %v2416
    %v2673 = vmul.f32 %v2545, %v2417
    %v2674 = vmul.f32 %v2546, %v2418
    %v2675 = vmul.f32 %v2547, %v2419
    %v2676 = vmul.f32 %v2548, %v2420
    %v2677 = vmul.f32 %v2549, %v2421
    %v2678 = vmul.f32 %v2550, %v2422
    %v2679 = vmul.f32 %v2551, %v2423
    %v2680 = vmul.f32 %v2552, %v2424
    %v2681 = vmul.f32 %v2553, %v2425
    %v2682 = vmul.f32 %v2554, %v2426
    %v2683 = vmul.f32 %v2555, %v2427
    %v2684 = vmul.f32 %v2556, %v2428
    %v2685 = vmul.f32 %v2557, %v2429
    %v2686 = vmul.f32 %v2558, %v2430
    %v2687 = vmul.f32 %v2559, %v2431
    %v2688 = vmul.f32 %v2560, %v2432
    %v2689 = vmul.f32 %v2561, %v2433
    %v2690 = vmul.f32 %v2562, %v2434
    %v2691 = vmul.f32 %v2563, %v2435
    %v2692 = vmul.f32 %v2564, %v2436
    %v2693 = vmul.f32 %v2565, %v2437
    %v2694 = vmul.f32 %v2566, %v2438
    %v2695 = vmul.f32 %v2567, %v2439
    %v2696 = vmul.f32 %v2568, %v2440
    %v2697 = vmul.f32 %v2569, %v2441
    %v2698 = vmul.f32 %v2570, %v2442
    %v2699 = vmul.f32 %v2571, %v2443
    %v2700 = vmul.f32 %v2572, %v2444
    %v2701 = vmul.f32 %v2573, %v2445
    %v2702 = vmul.f32 %v2574, %v2446
    %v2703 = vmul.f32 %v2575, %v2447
    %v2704 = vmul.f32 %v2576, %v2448
    %v2705 = vmul.f32 %v2577, %v2449
    %v2706 = vmul.f32 %v2578, %v2450
    %v2707 = vmul.f32 %v2579, %v2451
    %v2708 = vmul.f32 %v2580, %v2452
    %v2709 = vmul.f32 %v2581, %v2453
    %v2710 = vmul.f32 %v2582, %v2454
    %v2711 = vmul.f32 %v2583, %v2455
    %v2712 = vmul.f32 %v2584, %v2456
    %v2713 = vmul.f32 %v2585, %v2457
    %v2714 = vmul.f32 %v2586, %v2458
    %v2715 = vmul.f32 %v2587, %v2459
    %v2716 = vmul.f32 %v2588, %v2460
    %v2717 = vmul.f32 %v2589, %v2461
    %v2718 = vmul.f32 %v2590, %v2462
    %v2719 = vmul.f32 %v2591, %v2463
    %v2720 = vmul.f32 %v2592, %v2464
    %v2721 = vmul.f32 %v2593, %v2465
    %v2722 = vmul.f32 %v2594, %v2466
    %v2723 = vmul.f32 %v2595, %v2467
    %v2724 = vmul.f32 %v2596, %v2468
    %v2725 = vmul.f32 %v2597, %v2469
    %v2726 = vmul.f32 %v2598, %v2470
    %v2727 = vmul.f32 %v2599, %v2471
    %v2728 = vmul.f32 %v2600, %v2472
    %v2729 = vmul.f32 %v2601, %v2473
    %v2730 = vmul.f32 %v2602, %v2474
    %v2731 = vmul.f32 %v2603, %v2475
    %v2732 = vmul.f32 %v2604, %v2476
    %v2733 = vmul.f32 %v2605, %v2477
    %v2734 = vmul.f32 %v2606, %v2478
    %v2735 = vmul.f32 %v2607, %v2479
    %v2736 = vmul.f32 %v2608, %v2480
    %v2737 = vmul.f32 %v2609, %v2481
    %v2738 = vmul.f32 %v2610, %v2482
    %v2739 = vmul.f32 %v2611, %v2483
    %v2740 = vmul.f32 %v2612, %v2484
    %v2741 = vmul.f32 %v2613, %v2485
    %v2742 = vmul.f32 %v2614, %v2486
    %v2743 = vmul.f32 %v2615, %v2487
    %v2744 = vmul.f32 %v2616, %v2488
    %v2745 = vmul.f32 %v2617, %v2489
    %v2746 = vmul.f32 %v2618, %v2490
    %v2747 = vmul.f32 %v2619, %v2491
    %v2748 = vmul.f32 %v2620, %v2492
    %v2749 = vmul.f32 %v2621, %v2493
    %v2750 = vmul.f32 %v2622, %v2494
    %v2751 = vmul.f32 %v2623, %v2495
    %v2752 = vmul.f32 %v2624, %v2496
    %v2753 = vmul.f32 %v2625, %v2497
    %v2754 = vmul.f32 %v2626, %v2498
    %v2755 = vmul.f32 %v2627, %v2499
    %v2756 = vmul.f32 %v2628, %v2500
    %v2757 = vmul.f32 %v2629, %v2501
    %v2758 = vmul.f32 %v2630, %v2502
    %v2759 = vmul.f32 %v2631, %v2503
    %v2760 = vmul.f32 %v2632, %v2504
    %v2761 = vld [vmem:[%s2] sm:$0xff]
    %v2762 = vld [vmem:[%s2 + $0x8] sm:$0xff]
    %v2765 = vcombine.high %v2761, %v2761
    %v2766 = vcombine.high %v2762, %v2762
    %2769 = vmatprep.subr.mxu0 %v2634
    %2770 = vmatpush1.msra.mxu0 %v2633
    %2771 = vmatprep.subr.mxu0 %v2636
    %2772 = vmatpush1.msra.mxu0 %v2635
    %2773 = vmatprep.subr.mxu0 %v2638
    %2774 = vmatpush1.msra.mxu0 %v2637
    %2775 = vmatprep.subr.mxu0 %v2640
    %2776 = vmatpush1.msra.mxu0 %v2639
    %2777 = vmatprep.subr.mxu0 %v2642
    %2778 = vmatpush1.msra.mxu0 %v2641
    %2779 = vmatprep.subr.mxu0 %v2644
    %2780 = vmatpush1.msra.mxu0 %v2643
    %2781 = vmatprep.subr.mxu0 %v2646
    %2782 = vmatpush1.msra.mxu0 %v2645
    %2783 = vmatprep.subr.mxu0 %v2648
    %2784 = vmatpush1.msra.mxu0 %v2647
    %2785 = vmatprep.subr.mxu0 %v2650
    %2786 = vmatpush1.msra.mxu0 %v2649
    %2787 = vmatprep.subr.mxu0 %v2652
    %2788 = vmatpush1.msra.mxu0 %v2651
    %2789 = vmatprep.subr.mxu0 %v2654
    %2790 = vmatpush1.msra.mxu0 %v2653
    %2791 = vmatprep.subr.mxu0 %v2656
    %2792 = vmatpush1.msra.mxu0 %v2655
    %2793 = vmatprep.subr.mxu0 %v2658
    %2794 = vmatpush1.msra.mxu0 %v2657
    %2795 = vmatprep.subr.mxu0 %v2660
    %2796 = vmatpush1.msra.mxu0 %v2659
    %2797 = vmatprep.subr.mxu0 %v2662
    %2798 = vmatpush1.msra.mxu0 %v2661
    %2799 = vmatprep.subr.mxu0 %v2664
    %2800 = vmatpush1.msra.mxu0 %v2663
    %2801 = vmatprep.subr.mxu0 %v2666
    %2802 = vmatpush1.msra.mxu0 %v2665
    %2803 = vmatprep.subr.mxu0 %v2668
    %2804 = vmatpush1.msra.mxu0 %v2667
    %2805 = vmatprep.subr.mxu0 %v2670
    %2806 = vmatpush1.msra.mxu0 %v2669
    %2807 = vmatprep.subr.mxu0 %v2672
    %2808 = vmatpush1.msra.mxu0 %v2671
    %2809 = vmatprep.subr.mxu0 %v2674
    %2810 = vmatpush1.msra.mxu0 %v2673
    %2811 = vmatprep.subr.mxu0 %v2676
    %2812 = vmatpush1.msra.mxu0 %v2675
    %2813 = vmatprep.subr.mxu0 %v2678
    %2814 = vmatpush1.msra.mxu0 %v2677
    %2815 = vmatprep.subr.mxu0 %v2680
    %2816 = vmatpush1.msra.mxu0 %v2679
    %2817 = vmatprep.subr.mxu0 %v2682
    %2818 = vmatpush1.msra.mxu0 %v2681
    %2819 = vmatprep.subr.mxu0 %v2684
    %2820 = vmatpush1.msra.mxu0 %v2683
    %2821 = vmatprep.subr.mxu0 %v2686
    %2822 = vmatpush1.msra.mxu0 %v2685
    %2823 = vmatprep.subr.mxu0 %v2688
    %2824 = vmatpush1.msra.mxu0 %v2687
    %2825 = vmatprep.subr.mxu0 %v2690
    %2826 = vmatpush1.msra.mxu0 %v2689
    %2827 = vmatprep.subr.mxu0 %v2692
    %2828 = vmatpush1.msra.mxu0 %v2691
    %2829 = vmatprep.subr.mxu0 %v2694
    %2830 = vmatpush1.msra.mxu0 %v2693
    %2831 = vmatprep.subr.mxu0 %v2696
    %2832 = vmatpush1.msra.mxu0 %v2695
    %2833 = vmatprep.mubr.f32.mxu0 %v2765
    %2834 = vmatmul.mubr.f32.gmra.mrb[0].mxu0 %v2761
    %v2835 = vpop.f32.mrb[0].mxu0
    %v2836 = vadd.f32 0.0, %v2835
    %v2837 = vpop.f32.mrb[0].mxu0
    %v2838 = vadd.f32 0.0, %v2837
    %2839 = vdwg.mxu0
    %2840 = vmatprep.subr.mxu0 %v2698
    %2841 = vmatpush1.msra.mxu0 %v2697
    %2842 = vmatprep.subr.mxu0 %v2700
    %2843 = vmatpush1.msra.mxu0 %v2699
    %2844 = vmatprep.subr.mxu0 %v2702
    %2845 = vmatpush1.msra.mxu0 %v2701
    %2846 = vmatprep.subr.mxu0 %v2704
    %2847 = vmatpush1.msra.mxu0 %v2703
    %2848 = vmatprep.subr.mxu0 %v2706
    %2849 = vmatpush1.msra.mxu0 %v2705
    %2850 = vmatprep.subr.mxu0 %v2708
    %2851 = vmatpush1.msra.mxu0 %v2707
    %2852 = vmatprep.subr.mxu0 %v2710
    %2853 = vmatpush1.msra.mxu0 %v2709
    %2854 = vmatprep.subr.mxu0 %v2712
    %2855 = vmatpush1.msra.mxu0 %v2711
    %2856 = vmatprep.subr.mxu0 %v2714
    %2857 = vmatpush1.msra.mxu0 %v2713
    %2858 = vmatprep.subr.mxu0 %v2716
    %2859 = vmatpush1.msra.mxu0 %v2715
    %2860 = vmatprep.subr.mxu0 %v2718
    %2861 = vmatpush1.msra.mxu0 %v2717
    %2862 = vmatprep.subr.mxu0 %v2720
    %2863 = vmatpush1.msra.mxu0 %v2719
    %2864 = vmatprep.subr.mxu0 %v2722
    %2865 = vmatpush1.msra.mxu0 %v2721
    %2866 = vmatprep.subr.mxu0 %v2724
    %2867 = vmatpush1.msra.mxu0 %v2723
    %2868 = vmatprep.subr.mxu0 %v2726
    %2869 = vmatpush1.msra.mxu0 %v2725
    %2870 = vmatprep.subr.mxu0 %v2728
    %2871 = vmatpush1.msra.mxu0 %v2727
    %2872 = vmatprep.subr.mxu0 %v2730
    %2873 = vmatpush1.msra.mxu0 %v2729
    %2874 = vmatprep.subr.mxu0 %v2732
    %2875 = vmatpush1.msra.mxu0 %v2731
    %2876 = vmatprep.subr.mxu0 %v2734
    %2877 = vmatpush1.msra.mxu0 %v2733
    %2878 = vmatprep.subr.mxu0 %v2736
    %2879 = vmatpush1.msra.mxu0 %v2735
    %2880 = vmatprep.subr.mxu0 %v2738
    %2881 = vmatpush1.msra.mxu0 %v2737
    %2882 = vmatprep.subr.mxu0 %v2740
    %2883 = vmatpush1.msra.mxu0 %v2739
    %2884 = vmatprep.subr.mxu0 %v2742
    %2885 = vmatpush1.msra.mxu0 %v2741
    %2886 = vmatprep.subr.mxu0 %v2744
    %2887 = vmatpush1.msra.mxu0 %v2743
    %2888 = vmatprep.subr.mxu0 %v2746
    %2889 = vmatpush1.msra.mxu0 %v2745
    %2890 = vmatprep.subr.mxu0 %v2748
    %2891 = vmatpush1.msra.mxu0 %v2747
    %2892 = vmatprep.subr.mxu0 %v2750
    %2893 = vmatpush1.msra.mxu0 %v2749
    %2894 = vmatprep.subr.mxu0 %v2752
    %2895 = vmatpush1.msra.mxu0 %v2751
    %2896 = vmatprep.subr.mxu0 %v2754
    %2897 = vmatpush1.msra.mxu0 %v2753
    %2898 = vmatprep.subr.mxu0 %v2756
    %2899 = vmatpush1.msra.mxu0 %v2755
    %2900 = vmatprep.subr.mxu0 %v2758
    %2901 = vmatpush1.msra.mxu0 %v2757
    %2902 = vmatprep.subr.mxu0 %v2760
    %2903 = vmatpush1.msra.mxu0 %v2759
    %2904 = vmatprep.mubr.f32.mxu0 %v2766
    %2905 = vmatmul.mubr.f32.gmra.mrb[0].mxu0 %v2762
    %v2906 = vpop.f32.mrb[0].mxu0
    %v2907 = vadd.f32 %v2836, %v2906
    %v2908 = vpop.f32.mrb[0].mxu0
    %v2909 = vadd.f32 %v2838, %v2908
    %2910 = vdwg.mxu0
    %v2913 = vcombine.low %v2907, %v2909
    %2915 = vst [vmem:[#allocation2] sm:$0xff] %v2913
    // Predicated region
    $region14: #{tpu_custom_call.1} parent=1 // pred_check
      _
    $region15: #{tpu_custom_call.1} parent=1 // pred_check_branch
      %2917 = sbr.rel (0) target = $region17
    $region16: #{tpu_custom_call.1} parent=1 // pred_region
      %s2919 = ssub.s32 128, 128
      %2920 = vsyncadd [#allocation3], %s2919
      %s2922 = sshll.u32 [#allocation2], 4
      %s2923 = int_to_ptr.vmem [resolvable:$true] %s2922
      %2925 = dma.vmem_to_hbm [thread:$0]  %s2923, 128, %s3, [#allocation3]
    $region17: #{tpu_custom_call.1} parent=1 // pred_fallthru
      _
    // Predicated region
    $region18: #{tpu_custom_call.1} parent=1 // pred_check
      _
    $region19: #{tpu_custom_call.1} parent=1 // pred_check_branch
      %2927 = sbr.rel (0) target = $region21
    $region20: #{tpu_custom_call.1} parent=1 // pred_region
      %2928 = dma.done [#allocation3], 128
    $region21: #{tpu_custom_call.1} parent=1 // pred_fallthru
      _
    %2929 = vsyncpa [#allocation3], 1

</llo_original>
